<compile_context>
chip_gen: v5e
topology: v5e:2x2
jax: 0.10.0
libtpu: 0.0.40
codegen_flags: <defaults>
</compile_context>

<pallas_src>
import math

import jax
import jax.numpy as jnp
from jax import lax
from jax.experimental import pallas as pl
from jax.experimental.pallas import tpu as pltpu

# ---------------- model hyper-parameters (small, consistent with the module) --
VOCAB_SIZE  = 64
EMBED_SIZE  = 32
NUM_HEADS   = 4
HEAD_DIM    = EMBED_SIZE // NUM_HEADS       # 8
HIDDEN_SIZE = 64
NUM_LAYERS  = 2
SEQ_LEN     = 8
BATCH       = 2
EPS         = 1e-5
LANE        = 128                            # lane-dense padded logit width

# ---- packed weight-slab layout (rows) ----------------------------------------
# bf16 matrix slab: [embedding | per-layer: Wqkv, Wo, W1, W2 | fc_w], 128 lanes.
MAT_ROWS_PER_LAYER = EMBED_SIZE + EMBED_SIZE + EMBED_SIZE + HIDDEN_SIZE   # 160
MAT_LAYER_OFF      = VOCAB_SIZE                                           # 64
MAT_FC_OFF         = VOCAB_SIZE + NUM_LAYERS * MAT_ROWS_PER_LAYER         # 384
MAT_ROWS           = MAT_FC_OFF + EMBED_SIZE                              # 416
# f32 vector slab: per-layer 8 rows [bqkv,bo,g1,be1,b1,b2,g2,be2] + fc_b row.
VEC_ROWS_PER_LAYER = 8
VEC_FC_ROW         = NUM_LAYERS * VEC_ROWS_PER_LAYER                      # 16
VEC_ROWS           = VEC_FC_ROW + 1                                       # 17


# ---------------- fused forward kernel ----------------------------------------
def make_fused_kernel(*, has_mask, batch, seq):
    """Builds the fused kernel; `has_mask` specializes the trace."""
    H, E, Dh, HID, V = NUM_HEADS, EMBED_SIZE, HEAD_DIM, HIDDEN_SIZE, VOCAB_SIZE
    BS = batch * seq
    scale = 1.0 / math.sqrt(Dh)

    def kernel(*refs):
        if has_mask:
            ids_ref, mask_ref, wmat_ref, wvec_ref, o_ref = refs
        else:
            ids_ref, wmat_ref, wvec_ref, o_ref = refs
            mask_ref = None

        # ---- embedding as a one-hot MXU matmul (rows are b-major: r = b*S+s) --
        ids = ids_ref[...]                                        # (BS, 1) int32
        iota_v = lax.broadcasted_iota(jnp.int32, (BS, V), 1)
        one_hot = jnp.where(ids == iota_v, 1.0, 0.0).astype(jnp.bfloat16)
        emb = wmat_ref[0:V, 0:E]                                  # (V, E) bf16
        h = jnp.dot(one_hot, emb, preferred_element_type=jnp.float32)   # (BS, E) f32

        mask = mask_ref[...] if has_mask else None                # (S, S) additive f32

        for l in range(NUM_LAYERS):                               # static unroll
            wb = MAT_LAYER_OFF + l * MAT_ROWS_PER_LAYER
            vb = l * VEC_ROWS_PER_LAYER
            wqkv = wmat_ref[wb          : wb + E,        0:3 * E]   # (E, 3E) bf16
            wo   = wmat_ref[wb + E      : wb + 2 * E,    0:E]       # (E, E)
            w1   = wmat_ref[wb + 2 * E  : wb + 3 * E,    0:HID]     # (E, HID)
            w2   = wmat_ref[wb + 3 * E  : wb + 3 * E + HID, 0:E]    # (HID, E)
            bqkv = wvec_ref[vb + 0 : vb + 1, 0:3 * E]               # (1, 3E) f32
            bo   = wvec_ref[vb + 1 : vb + 2, 0:E]
            g1   = wvec_ref[vb + 2 : vb + 3, 0:E]
            be1  = wvec_ref[vb + 3 : vb + 4, 0:E]
            b1   = wvec_ref[vb + 4 : vb + 5, 0:HID]
            b2   = wvec_ref[vb + 5 : vb + 6, 0:E]
            g2   = wvec_ref[vb + 6 : vb + 7, 0:E]
            be2  = wvec_ref[vb + 7 : vb + 8, 0:E]

            # ---- fused QKV projection: one (BS,E)@(E,3E) matmul -------------
            qkv = jnp.dot(h.astype(jnp.bfloat16), wqkv,
                          preferred_element_type=jnp.float32) + bqkv     # (BS, 3E) f32

            # ---- split heads into a (H*B, S, Dh) batch (leading-dim concat) --
            def split_heads(col_off):
                return jnp.concatenate(
                    [qkv[:, col_off + hh * Dh: col_off + (hh + 1) * Dh]
                        .reshape(batch, seq, Dh)
                     for hh in range(H)], axis=0)                        # (H*B, S, Dh)

            q = split_heads(0)
            k = split_heads(E)
            v = split_heads(2 * E)

            # ---- scores + softmax, batched over all (head, batch) tiles ------
            sc = jnp.einsum('zqd,zkd->zqk',
                            q.astype(jnp.bfloat16), k.astype(jnp.bfloat16),
                            preferred_element_type=jnp.float32) * scale   # (H*B,S,S)
            if has_mask:
                sc = sc + mask[None]
            sc = sc - jnp.max(sc, axis=-1, keepdims=True)
            p = jnp.exp(sc)
            p = p / jnp.sum(p, axis=-1, keepdims=True)                    # exact divide
            p = p.astype(jnp.bfloat16)

            ctx = jnp.einsum('zqk,zkd->zqd', p, v.astype(jnp.bfloat16),
                             preferred_element_type=jnp.float32)          # (H*B,S,Dh)
            # concat heads back onto the feature axis -> (BS, E)
            ctx_cat = jnp.concatenate(
                [ctx[hh * batch:(hh + 1) * batch].reshape(BS, Dh)
                 for hh in range(H)], axis=1)

            # ---- single out-projection matmul --------------------------------
            attn = jnp.dot(ctx_cat.astype(jnp.bfloat16), wo,
                           preferred_element_type=jnp.float32) + bo

            # ---- residual + LayerNorm 1 (post-norm, biased variance) ---------
            h1 = h + attn
            mu = jnp.mean(h1, axis=-1, keepdims=True)
            var = jnp.mean(jnp.square(h1 - mu), axis=-1, keepdims=True)
            h1 = (h1 - mu) * lax.rsqrt(var + EPS) * g1 + be1

            # ---- feed forward: Linear -> ReLU -> Linear -----------------------
            ff = jnp.dot(h1.astype(jnp.bfloat16), w1,
                         preferred_element_type=jnp.float32) + b1
            ff = jnp.maximum(ff, 0.0)
            ff = jnp.dot(ff.astype(jnp.bfloat16), w2,
                         preferred_element_type=jnp.float32) + b2

            # ---- residual + LayerNorm 2 ---------------------------------------
            h2 = h1 + ff
            mu2 = jnp.mean(h2, axis=-1, keepdims=True)
            var2 = jnp.mean(jnp.square(h2 - mu2), axis=-1, keepdims=True)
            h = (h2 - mu2) * lax.rsqrt(var2 + EPS) * g2 + be2

        # ---- final Linear, lane-dense (V padded to 128 with zero columns) -----
        fcw = wmat_ref[MAT_FC_OFF:MAT_FC_OFF + E, :]                     # (E,128) bf16
        fcb = wvec_ref[VEC_FC_ROW:VEC_FC_ROW + 1, :]                     # (1,128) f32
        logits = jnp.dot(h.astype(jnp.bfloat16), fcw,
                         preferred_element_type=jnp.float32) + fcb       # (BS,128)
        # emit s-major as (S, B*128): wrapper only reshapes + slices (no transpose).
        o_ref[...] = jnp.concatenate(
            [logits[b * seq:(b + 1) * seq, :] for b in range(batch)], axis=1)

    return kernel


# ---------------- parameters ---------------------------------------------------
def init_params(key):
    """Natural (PyTorch-like, pre-transposed x@W) parameter layout."""
    ks = jax.random.split(key, 4 + NUM_LAYERS)
    s = 0.02
    params = {
        "embedding": s * jax.random.normal(ks[0], (VOCAB_SIZE, EMBED_SIZE), jnp.float32),
        "fc_w_t":    s * jax.random.normal(ks[1], (EMBED_SIZE, VOCAB_SIZE), jnp.float32),
        "fc_b":      s * jax.random.normal(ks[2], (VOCAB_SIZE,), jnp.float32),
        "layers": [],
    }
    for l in range(NUM_LAYERS):
        k0, k1, k2, k3, k4 = jax.random.split(ks[4 + l], 5)
        params["layers"].append({
            "wqkv": s * jax.random.normal(k0, (EMBED_SIZE, 3 * EMBED_SIZE), jnp.float32),
            "bqkv": s * jax.random.normal(k4, (3 * EMBED_SIZE,), jnp.float32),
            "wo":   s * jax.random.normal(k1, (EMBED_SIZE, EMBED_SIZE), jnp.float32),
            "bo":   jnp.zeros((EMBED_SIZE,), jnp.float32),
            "g1":   jnp.ones((EMBED_SIZE,), jnp.float32),
            "be1":  jnp.zeros((EMBED_SIZE,), jnp.float32),
            "w1":   s * jax.random.normal(k2, (EMBED_SIZE, HIDDEN_SIZE), jnp.float32),
            "b1":   jnp.zeros((HIDDEN_SIZE,), jnp.float32),
            "w2":   s * jax.random.normal(k3, (HIDDEN_SIZE, EMBED_SIZE), jnp.float32),
            "b2":   jnp.zeros((EMBED_SIZE,), jnp.float32),
            "g2":   jnp.ones((EMBED_SIZE,), jnp.float32),
            "be2":  jnp.zeros((EMBED_SIZE,), jnp.float32),
        })
    return params


def pack_params(params):
    """One-time repack into two VMEM slabs (bf16 matrices, f32 biases/gains)."""
    E, HID, V = EMBED_SIZE, HIDDEN_SIZE, VOCAB_SIZE
    wmat = jnp.zeros((MAT_ROWS, LANE), jnp.float32)
    wmat = wmat.at[0:V, 0:E].set(params["embedding"])
    for l, lp in enumerate(params["layers"]):
        b = MAT_LAYER_OFF + l * MAT_ROWS_PER_LAYER
        wmat = wmat.at[b          : b + E,         0:3 * E].set(lp["wqkv"])
        wmat = wmat.at[b + E      : b + 2 * E,     0:E].set(lp["wo"])
        wmat = wmat.at[b + 2 * E  : b + 3 * E,     0:HID].set(lp["w1"])
        wmat = wmat.at[b + 3 * E  : b + 3 * E + HID, 0:E].set(lp["w2"])
    # fc weight zero-padded V=64 -> 128 lanes; padded columns are never consumed
    # (wrapper slices logits back to V).
    wmat = wmat.at[MAT_FC_OFF:MAT_FC_OFF + E, 0:V].set(params["fc_w_t"])
    wmat = wmat.astype(jnp.bfloat16)

    wvec = jnp.zeros((VEC_ROWS, LANE), jnp.float32)
    for l, lp in enumerate(params["layers"]):
        vb = l * VEC_ROWS_PER_LAYER
        wvec = wvec.at[vb + 0, 0:3 * E].set(lp["bqkv"])
        wvec = wvec.at[vb + 1, 0:E].set(lp["bo"])
        wvec = wvec.at[vb + 2, 0:E].set(lp["g1"])
        wvec = wvec.at[vb + 3, 0:E].set(lp["be1"])
        wvec = wvec.at[vb + 4, 0:HID].set(lp["b1"])
        wvec = wvec.at[vb + 5, 0:E].set(lp["b2"])
        wvec = wvec.at[vb + 6, 0:E].set(lp["g2"])
        wvec = wvec.at[vb + 7, 0:E].set(lp["be2"])
    wvec = wvec.at[VEC_FC_ROW, 0:V].set(params["fc_b"])
    return {"wmat": wmat, "wvec": wvec}


# ---------------- forward wrapper ----------------------------------------------
def base_transformer_forward(x_ids, kp, src_mask=None):
    """x_ids: (S, B) int token ids -> logits (S, B, V), matching PyTorch layout.
    Dropout layers are identity (eval-mode forward)."""
    S_, B_ = x_ids.shape
    # b-major row order (r = b*S + s) so attention groups are contiguous row blocks.
    ids = x_ids.astype(jnp.int32).T.reshape(B_ * S_, 1)

    has_mask = src_mask is not None
    inputs = [ids]
    if has_mask:
        m = src_mask
        if m.dtype == jnp.bool_:
            # PyTorch bool mask: True = masked -> large negative additive mask.
            m = jnp.where(m, jnp.float32(-1e9), jnp.float32(0.0))
        inputs.append(m.astype(jnp.float32))
    inputs += [kp["wmat"], kp["wvec"]]

    vmem = pl.BlockSpec(memory_space=pltpu.MemorySpace.VMEM)
    kernel = make_fused_kernel(has_mask=has_mask, batch=B_, seq=S_)
    out = pl.pallas_call(
        kernel,
        out_shape=jax.ShapeDtypeStruct((S_, B_ * LANE), jnp.float32),
        in_specs=[vmem] * len(inputs),
        out_specs=vmem,
        # Gridless: whole problem (~150 KB) resident in VMEM. If B*S grows, add a
        # leading "parallel" grid axis over row blocks (v7x: 2 TCs, 64 MiB VMEM).
    )(*inputs)

    # (S, B*128) -> (S, B, 128) -> slice padded logit columns off.
    return out.reshape(S_, B_, LANE)[:, :, :VOCAB_SIZE]


if __name__ == "__main__":
    key = jax.random.PRNGKey(0)
    pkey, dkey = jax.random.split(key)
    params = init_params(pkey)
    kp = pack_params(params)
    x_ids = jax.random.randint(dkey, (SEQ_LEN, BATCH), 0, VOCAB_SIZE, dtype=jnp.int32)

    # no-mask path
    fwd = jax.jit(lambda ids, p: base_transformer_forward(ids, p, None))
    out = jax.block_until_ready(fwd(x_ids, kp))
    assert out.shape == (SEQ_LEN, BATCH, VOCAB_SIZE)
    assert bool(jnp.all(jnp.isfinite(out)))

    # bool causal-mask path (True = masked), exercises the mask branch
    causal_mask = ~jnp.tril(jnp.ones((SEQ_LEN, SEQ_LEN), dtype=bool))
    fwd_m = jax.jit(lambda ids, p, m: base_transformer_forward(ids, p, m))
    out_m = jax.block_until_ready(fwd_m(x_ids, kp, causal_mask))
    assert out_m.shape == (SEQ_LEN, BATCH, VOCAB_SIZE)
    assert bool(jnp.all(jnp.isfinite(out_m)))

    print("KERNEL_OK")
</pallas_src>

<mosaic_0001>
module attributes {stable_mosaic.version = 11 : i64} {
  func.func @kernel(%arg0: memref<16x1xi32, #tpu.memory_space<vmem>>, %arg1: memref<416x128xbf16, #tpu.memory_space<vmem>>, %arg2: memref<17x128xf32, #tpu.memory_space<vmem>>, %arg3: memref<8x256xf32, #tpu.memory_space<vmem>>) attributes {dimension_semantics = [], scalar_prefetch = 0 : i64, scratch_operands = 0 : i64, tpu.core_type = #tpu.core_type<tc>} {
    %c0 = arith.constant 0 : index
    %c0_0 = arith.constant 0 : index
    %0 = vector.load %arg0[%c0, %c0_0] : memref<16x1xi32, #tpu.memory_space<vmem>>, vector<16x1xi32>
    %1 = tpu.iota {dimensions = array<i32: 1>} : vector<16x64xi32>
    %2 = vector.broadcast %0 : vector<16x1xi32> to vector<16x64xi32>
    %3 = arith.cmpi eq, %2, %1 : vector<16x64xi32>
    %cst = arith.constant 1.000000e+00 : f32
    %cst_1 = arith.constant 0.000000e+00 : f32
    %4 = vector.broadcast %cst : f32 to vector<16x64xf32>
    %5 = vector.broadcast %cst_1 : f32 to vector<16x64xf32>
    %6 = arith.select %3, %4, %5 : vector<16x64xi1>, vector<16x64xf32>
    %7 = arith.truncf %6 : vector<16x64xf32> to vector<16x64xbf16>
    %c0_2 = arith.constant 0 : index
    %c0_3 = arith.constant 0 : index
    %8 = vector.load %arg1[%c0_2, %c0_3] : memref<416x128xbf16, #tpu.memory_space<vmem>>, vector<64x32xbf16>
    %cst_4 = arith.constant dense<0.000000e+00> : vector<16x32xf32>
    %9 = tpu.matmul %7, %8, %cst_4 {dimension_numbers = #tpu.dot_dimension_numbers<[1], [0], [0], [1], [0, 0, 1, 1], [], []>} : vector<16x64xbf16>, vector<64x32xbf16>, vector<16x32xf32> -> vector<16x32xf32>
    %c64 = arith.constant 64 : index
    %c0_5 = arith.constant 0 : index
    %10 = vector.load %arg1[%c64, %c0_5] : memref<416x128xbf16, #tpu.memory_space<vmem>>, vector<32x96xbf16>
    %c96 = arith.constant 96 : index
    %c0_6 = arith.constant 0 : index
    %11 = vector.load %arg1[%c96, %c0_6] : memref<416x128xbf16, #tpu.memory_space<vmem>>, vector<32x32xbf16>
    %c128 = arith.constant 128 : index
    %c0_7 = arith.constant 0 : index
    %12 = vector.load %arg1[%c128, %c0_7] : memref<416x128xbf16, #tpu.memory_space<vmem>>, vector<32x64xbf16>
    %c160 = arith.constant 160 : index
    %c0_8 = arith.constant 0 : index
    %13 = vector.load %arg1[%c160, %c0_8] : memref<416x128xbf16, #tpu.memory_space<vmem>>, vector<64x32xbf16>
    %c0_9 = arith.constant 0 : index
    %c0_10 = arith.constant 0 : index
    %14 = vector.load %arg2[%c0_9, %c0_10] : memref<17x128xf32, #tpu.memory_space<vmem>>, vector<1x96xf32>
    %c1 = arith.constant 1 : index
    %c0_11 = arith.constant 0 : index
    %15 = vector.load %arg2[%c1, %c0_11] : memref<17x128xf32, #tpu.memory_space<vmem>>, vector<1x32xf32>
    %c2 = arith.constant 2 : index
    %c0_12 = arith.constant 0 : index
    %16 = vector.load %arg2[%c2, %c0_12] : memref<17x128xf32, #tpu.memory_space<vmem>>, vector<1x32xf32>
    %c3 = arith.constant 3 : index
    %c0_13 = arith.constant 0 : index
    %17 = vector.load %arg2[%c3, %c0_13] : memref<17x128xf32, #tpu.memory_space<vmem>>, vector<1x32xf32>
    %c4 = arith.constant 4 : index
    %c0_14 = arith.constant 0 : index
    %18 = vector.load %arg2[%c4, %c0_14] : memref<17x128xf32, #tpu.memory_space<vmem>>, vector<1x64xf32>
    %c5 = arith.constant 5 : index
    %c0_15 = arith.constant 0 : index
    %19 = vector.load %arg2[%c5, %c0_15] : memref<17x128xf32, #tpu.memory_space<vmem>>, vector<1x32xf32>
    %c6 = arith.constant 6 : index
    %c0_16 = arith.constant 0 : index
    %20 = vector.load %arg2[%c6, %c0_16] : memref<17x128xf32, #tpu.memory_space<vmem>>, vector<1x32xf32>
    %c7 = arith.constant 7 : index
    %c0_17 = arith.constant 0 : index
    %21 = vector.load %arg2[%c7, %c0_17] : memref<17x128xf32, #tpu.memory_space<vmem>>, vector<1x32xf32>
    %22 = arith.truncf %9 : vector<16x32xf32> to vector<16x32xbf16>
    %cst_18 = arith.constant dense<0.000000e+00> : vector<16x96xf32>
    %23 = tpu.matmul %22, %10, %cst_18 {dimension_numbers = #tpu.dot_dimension_numbers<[1], [0], [0], [1], [0, 0, 1, 1], [], []>} : vector<16x32xbf16>, vector<32x96xbf16>, vector<16x96xf32> -> vector<16x96xf32>
    %24 = vector.broadcast %14 : vector<1x96xf32> to vector<16x96xf32>
    %25 = arith.addf %23, %24 : vector<16x96xf32>
    %26 = vector.extract_strided_slice %25 {offsets = [0, 0], sizes = [16, 8], strides = [1, 1]} : vector<16x96xf32> to vector<16x8xf32>
    %27 = vector.shape_cast %26 : vector<16x8xf32> to vector<2x8x8xf32>
    %28 = vector.extract_strided_slice %25 {offsets = [0, 8], sizes = [16, 8], strides = [1, 1]} : vector<16x96xf32> to vector<16x8xf32>
    %29 = vector.shape_cast %28 : vector<16x8xf32> to vector<2x8x8xf32>
    %30 = vector.extract_strided_slice %25 {offsets = [0, 16], sizes = [16, 8], strides = [1, 1]} : vector<16x96xf32> to vector<16x8xf32>
    %31 = vector.shape_cast %30 : vector<16x8xf32> to vector<2x8x8xf32>
    %32 = vector.extract_strided_slice %25 {offsets = [0, 24], sizes = [16, 8], strides = [1, 1]} : vector<16x96xf32> to vector<16x8xf32>
    %33 = vector.shape_cast %32 : vector<16x8xf32> to vector<2x8x8xf32>
    %34 = tpu.concatenate %27, %29, %31, %33 in 0 : vector<2x8x8xf32>, vector<2x8x8xf32>, vector<2x8x8xf32>, vector<2x8x8xf32> -> vector<8x8x8xf32>
    %35 = vector.extract_strided_slice %25 {offsets = [0, 32], sizes = [16, 8], strides = [1, 1]} : vector<16x96xf32> to vector<16x8xf32>
    %36 = vector.shape_cast %35 : vector<16x8xf32> to vector<2x8x8xf32>
    %37 = vector.extract_strided_slice %25 {offsets = [0, 40], sizes = [16, 8], strides = [1, 1]} : vector<16x96xf32> to vector<16x8xf32>
    %38 = vector.shape_cast %37 : vector<16x8xf32> to vector<2x8x8xf32>
    %39 = vector.extract_strided_slice %25 {offsets = [0, 48], sizes = [16, 8], strides = [1, 1]} : vector<16x96xf32> to vector<16x8xf32>
    %40 = vector.shape_cast %39 : vector<16x8xf32> to vector<2x8x8xf32>
    %41 = vector.extract_strided_slice %25 {offsets = [0, 56], sizes = [16, 8], strides = [1, 1]} : vector<16x96xf32> to vector<16x8xf32>
    %42 = vector.shape_cast %41 : vector<16x8xf32> to vector<2x8x8xf32>
    %43 = tpu.concatenate %36, %38, %40, %42 in 0 : vector<2x8x8xf32>, vector<2x8x8xf32>, vector<2x8x8xf32>, vector<2x8x8xf32> -> vector<8x8x8xf32>
    %44 = vector.extract_strided_slice %25 {offsets = [0, 64], sizes = [16, 8], strides = [1, 1]} : vector<16x96xf32> to vector<16x8xf32>
    %45 = vector.shape_cast %44 : vector<16x8xf32> to vector<2x8x8xf32>
    %46 = vector.extract_strided_slice %25 {offsets = [0, 72], sizes = [16, 8], strides = [1, 1]} : vector<16x96xf32> to vector<16x8xf32>
    %47 = vector.shape_cast %46 : vector<16x8xf32> to vector<2x8x8xf32>
    %48 = vector.extract_strided_slice %25 {offsets = [0, 80], sizes = [16, 8], strides = [1, 1]} : vector<16x96xf32> to vector<16x8xf32>
    %49 = vector.shape_cast %48 : vector<16x8xf32> to vector<2x8x8xf32>
    %50 = vector.extract_strided_slice %25 {offsets = [0, 88], sizes = [16, 8], strides = [1, 1]} : vector<16x96xf32> to vector<16x8xf32>
    %51 = vector.shape_cast %50 : vector<16x8xf32> to vector<2x8x8xf32>
    %52 = tpu.concatenate %45, %47, %49, %51 in 0 : vector<2x8x8xf32>, vector<2x8x8xf32>, vector<2x8x8xf32>, vector<2x8x8xf32> -> vector<8x8x8xf32>
    %53 = arith.truncf %34 : vector<8x8x8xf32> to vector<8x8x8xbf16>
    %54 = arith.truncf %43 : vector<8x8x8xf32> to vector<8x8x8xbf16>
    "tpu.trace_start"() <{level = 10 : i32, message = "zqd,zkd->zqk"}> : () -> ()
    %cst_19 = arith.constant dense<0.000000e+00> : vector<8x8x8xf32>
    %55 = tpu.matmul %53, %54, %cst_19 {dimension_numbers = #tpu.dot_dimension_numbers<[2], [2], [1], [1], [0, 0, 0, 1, 1, 1], [0], [0]>} : vector<8x8x8xbf16>, vector<8x8x8xbf16>, vector<8x8x8xf32> -> vector<8x8x8xf32>
    "tpu.trace_stop"() : () -> ()
    %cst_20 = arith.constant 0.353553385 : f32
    %56 = vector.broadcast %cst_20 : f32 to vector<8x8x8xf32>
    %57 = arith.mulf %55, %56 : vector<8x8x8xf32>
    %cst_21 = arith.constant dense<0xFF800000> : vector<8x8xf32>
    %58 = vector.multi_reduction <maximumf>, %57, %cst_21 [2] : vector<8x8x8xf32> to vector<8x8xf32>
    %59 = vector.shape_cast %58 : vector<8x8xf32> to vector<8x8x1xf32>
    %60 = vector.broadcast %59 : vector<8x8x1xf32> to vector<8x8x8xf32>
    %61 = arith.subf %57, %60 : vector<8x8x8xf32>
    %62 = math.exp %61 : vector<8x8x8xf32>
    %cst_22 = arith.constant dense<0.000000e+00> : vector<8x8xf32>
    %63 = vector.multi_reduction <add>, %62, %cst_22 [2] : vector<8x8x8xf32> to vector<8x8xf32>
    %64 = vector.shape_cast %63 : vector<8x8xf32> to vector<8x8x1xf32>
    %65 = vector.broadcast %64 : vector<8x8x1xf32> to vector<8x8x8xf32>
    %66 = arith.divf %62, %65 : vector<8x8x8xf32>
    %67 = arith.truncf %66 : vector<8x8x8xf32> to vector<8x8x8xbf16>
    %68 = arith.truncf %52 : vector<8x8x8xf32> to vector<8x8x8xbf16>
    "tpu.trace_start"() <{level = 10 : i32, message = "zqk,zkd->zqd"}> : () -> ()
    %cst_23 = arith.constant dense<0.000000e+00> : vector<8x8x8xf32>
    %69 = tpu.matmul %67, %68, %cst_23 {dimension_numbers = #tpu.dot_dimension_numbers<[2], [1], [1], [2], [0, 0, 0, 1, 1, 2], [0], [0]>} : vector<8x8x8xbf16>, vector<8x8x8xbf16>, vector<8x8x8xf32> -> vector<8x8x8xf32>
    "tpu.trace_stop"() : () -> ()
    %70 = vector.extract_strided_slice %69 {offsets = [0, 0, 0], sizes = [2, 8, 8], strides = [1, 1, 1]} : vector<8x8x8xf32> to vector<2x8x8xf32>
    %71 = vector.shape_cast %70 : vector<2x8x8xf32> to vector<16x8xf32>
    %72 = vector.extract_strided_slice %69 {offsets = [2, 0, 0], sizes = [2, 8, 8], strides = [1, 1, 1]} : vector<8x8x8xf32> to vector<2x8x8xf32>
    %73 = vector.shape_cast %72 : vector<2x8x8xf32> to vector<16x8xf32>
    %74 = vector.extract_strided_slice %69 {offsets = [4, 0, 0], sizes = [2, 8, 8], strides = [1, 1, 1]} : vector<8x8x8xf32> to vector<2x8x8xf32>
    %75 = vector.shape_cast %74 : vector<2x8x8xf32> to vector<16x8xf32>
    %76 = vector.extract_strided_slice %69 {offsets = [6, 0, 0], sizes = [2, 8, 8], strides = [1, 1, 1]} : vector<8x8x8xf32> to vector<2x8x8xf32>
    %77 = vector.shape_cast %76 : vector<2x8x8xf32> to vector<16x8xf32>
    %78 = tpu.concatenate %71, %73, %75, %77 in 1 : vector<16x8xf32>, vector<16x8xf32>, vector<16x8xf32>, vector<16x8xf32> -> vector<16x32xf32>
    %79 = arith.truncf %78 : vector<16x32xf32> to vector<16x32xbf16>
    %cst_24 = arith.constant dense<0.000000e+00> : vector<16x32xf32>
    %80 = tpu.matmul %79, %11, %cst_24 {dimension_numbers = #tpu.dot_dimension_numbers<[1], [0], [0], [1], [0, 0, 1, 1], [], []>} : vector<16x32xbf16>, vector<32x32xbf16>, vector<16x32xf32> -> vector<16x32xf32>
    %81 = vector.broadcast %15 : vector<1x32xf32> to vector<16x32xf32>
    %82 = arith.addf %80, %81 : vector<16x32xf32>
    %83 = arith.addf %9, %82 : vector<16x32xf32>
    %cst_25 = arith.constant dense<0.000000e+00> : vector<16xf32>
    %84 = vector.multi_reduction <add>, %83, %cst_25 [1] : vector<16x32xf32> to vector<16xf32>
    %85 = vector.shape_cast %84 : vector<16xf32> to vector<16x1xf32>
    %cst_26 = arith.constant 3.200000e+01 : f32
    %86 = vector.broadcast %cst_26 : f32 to vector<16x1xf32>
    %87 = arith.divf %85, %86 : vector<16x1xf32>
    %88 = vector.broadcast %87 : vector<16x1xf32> to vector<16x32xf32>
    %89 = arith.subf %83, %88 : vector<16x32xf32>
    %90 = arith.mulf %89, %89 : vector<16x32xf32>
    %cst_27 = arith.constant dense<0.000000e+00> : vector<16xf32>
    %91 = vector.multi_reduction <add>, %90, %cst_27 [1] : vector<16x32xf32> to vector<16xf32>
    %92 = vector.shape_cast %91 : vector<16xf32> to vector<16x1xf32>
    %cst_28 = arith.constant 3.200000e+01 : f32
    %93 = vector.broadcast %cst_28 : f32 to vector<16x1xf32>
    %94 = arith.divf %92, %93 : vector<16x1xf32>
    %95 = vector.broadcast %87 : vector<16x1xf32> to vector<16x32xf32>
    %96 = arith.subf %83, %95 : vector<16x32xf32>
    %cst_29 = arith.constant 9.99999974E-6 : f32
    %97 = vector.broadcast %cst_29 : f32 to vector<16x1xf32>
    %98 = arith.addf %94, %97 : vector<16x1xf32>
    %99 = math.rsqrt %98 : vector<16x1xf32>
    %100 = vector.broadcast %99 : vector<16x1xf32> to vector<16x32xf32>
    %101 = arith.mulf %96, %100 : vector<16x32xf32>
    %102 = vector.broadcast %16 : vector<1x32xf32> to vector<16x32xf32>
    %103 = arith.mulf %101, %102 : vector<16x32xf32>
    %104 = vector.broadcast %17 : vector<1x32xf32> to vector<16x32xf32>
    %105 = arith.addf %103, %104 : vector<16x32xf32>
    %106 = arith.truncf %105 : vector<16x32xf32> to vector<16x32xbf16>
    %cst_30 = arith.constant dense<0.000000e+00> : vector<16x64xf32>
    %107 = tpu.matmul %106, %12, %cst_30 {dimension_numbers = #tpu.dot_dimension_numbers<[1], [0], [0], [1], [0, 0, 1, 1], [], []>} : vector<16x32xbf16>, vector<32x64xbf16>, vector<16x64xf32> -> vector<16x64xf32>
    %108 = vector.broadcast %18 : vector<1x64xf32> to vector<16x64xf32>
    %109 = arith.addf %107, %108 : vector<16x64xf32>
    %cst_31 = arith.constant 0.000000e+00 : f32
    %110 = vector.broadcast %cst_31 : f32 to vector<16x64xf32>
    %111 = arith.maximumf %109, %110 : vector<16x64xf32>
    %112 = arith.truncf %111 : vector<16x64xf32> to vector<16x64xbf16>
    %cst_32 = arith.constant dense<0.000000e+00> : vector<16x32xf32>
    %113 = tpu.matmul %112, %13, %cst_32 {dimension_numbers = #tpu.dot_dimension_numbers<[1], [0], [0], [1], [0, 0, 1, 1], [], []>} : vector<16x64xbf16>, vector<64x32xbf16>, vector<16x32xf32> -> vector<16x32xf32>
    %114 = vector.broadcast %19 : vector<1x32xf32> to vector<16x32xf32>
    %115 = arith.addf %113, %114 : vector<16x32xf32>
    %116 = arith.addf %105, %115 : vector<16x32xf32>
    %cst_33 = arith.constant dense<0.000000e+00> : vector<16xf32>
    %117 = vector.multi_reduction <add>, %116, %cst_33 [1] : vector<16x32xf32> to vector<16xf32>
    %118 = vector.shape_cast %117 : vector<16xf32> to vector<16x1xf32>
    %cst_34 = arith.constant 3.200000e+01 : f32
    %119 = vector.broadcast %cst_34 : f32 to vector<16x1xf32>
    %120 = arith.divf %118, %119 : vector<16x1xf32>
    %121 = vector.broadcast %120 : vector<16x1xf32> to vector<16x32xf32>
    %122 = arith.subf %116, %121 : vector<16x32xf32>
    %123 = arith.mulf %122, %122 : vector<16x32xf32>
    %cst_35 = arith.constant dense<0.000000e+00> : vector<16xf32>
    %124 = vector.multi_reduction <add>, %123, %cst_35 [1] : vector<16x32xf32> to vector<16xf32>
    %125 = vector.shape_cast %124 : vector<16xf32> to vector<16x1xf32>
    %cst_36 = arith.constant 3.200000e+01 : f32
    %126 = vector.broadcast %cst_36 : f32 to vector<16x1xf32>
    %127 = arith.divf %125, %126 : vector<16x1xf32>
    %128 = vector.broadcast %120 : vector<16x1xf32> to vector<16x32xf32>
    %129 = arith.subf %116, %128 : vector<16x32xf32>
    %cst_37 = arith.constant 9.99999974E-6 : f32
    %130 = vector.broadcast %cst_37 : f32 to vector<16x1xf32>
    %131 = arith.addf %127, %130 : vector<16x1xf32>
    %132 = math.rsqrt %131 : vector<16x1xf32>
    %133 = vector.broadcast %132 : vector<16x1xf32> to vector<16x32xf32>
    %134 = arith.mulf %129, %133 : vector<16x32xf32>
    %135 = vector.broadcast %20 : vector<1x32xf32> to vector<16x32xf32>
    %136 = arith.mulf %134, %135 : vector<16x32xf32>
    %137 = vector.broadcast %21 : vector<1x32xf32> to vector<16x32xf32>
    %138 = arith.addf %136, %137 : vector<16x32xf32>
    %c224 = arith.constant 224 : index
    %c0_38 = arith.constant 0 : index
    %139 = vector.load %arg1[%c224, %c0_38] : memref<416x128xbf16, #tpu.memory_space<vmem>>, vector<32x96xbf16>
    %c256 = arith.constant 256 : index
    %c0_39 = arith.constant 0 : index
    %140 = vector.load %arg1[%c256, %c0_39] : memref<416x128xbf16, #tpu.memory_space<vmem>>, vector<32x32xbf16>
    %c288 = arith.constant 288 : index
    %c0_40 = arith.constant 0 : index
    %141 = vector.load %arg1[%c288, %c0_40] : memref<416x128xbf16, #tpu.memory_space<vmem>>, vector<32x64xbf16>
    %c320 = arith.constant 320 : index
    %c0_41 = arith.constant 0 : index
    %142 = vector.load %arg1[%c320, %c0_41] : memref<416x128xbf16, #tpu.memory_space<vmem>>, vector<64x32xbf16>
    %c8 = arith.constant 8 : index
    %c0_42 = arith.constant 0 : index
    %143 = vector.load %arg2[%c8, %c0_42] : memref<17x128xf32, #tpu.memory_space<vmem>>, vector<1x96xf32>
    %c9 = arith.constant 9 : index
    %c0_43 = arith.constant 0 : index
    %144 = vector.load %arg2[%c9, %c0_43] : memref<17x128xf32, #tpu.memory_space<vmem>>, vector<1x32xf32>
    %c10 = arith.constant 10 : index
    %c0_44 = arith.constant 0 : index
    %145 = vector.load %arg2[%c10, %c0_44] : memref<17x128xf32, #tpu.memory_space<vmem>>, vector<1x32xf32>
    %c11 = arith.constant 11 : index
    %c0_45 = arith.constant 0 : index
    %146 = vector.load %arg2[%c11, %c0_45] : memref<17x128xf32, #tpu.memory_space<vmem>>, vector<1x32xf32>
    %c12 = arith.constant 12 : index
    %c0_46 = arith.constant 0 : index
    %147 = vector.load %arg2[%c12, %c0_46] : memref<17x128xf32, #tpu.memory_space<vmem>>, vector<1x64xf32>
    %c13 = arith.constant 13 : index
    %c0_47 = arith.constant 0 : index
    %148 = vector.load %arg2[%c13, %c0_47] : memref<17x128xf32, #tpu.memory_space<vmem>>, vector<1x32xf32>
    %c14 = arith.constant 14 : index
    %c0_48 = arith.constant 0 : index
    %149 = vector.load %arg2[%c14, %c0_48] : memref<17x128xf32, #tpu.memory_space<vmem>>, vector<1x32xf32>
    %c15 = arith.constant 15 : index
    %c0_49 = arith.constant 0 : index
    %150 = vector.load %arg2[%c15, %c0_49] : memref<17x128xf32, #tpu.memory_space<vmem>>, vector<1x32xf32>
    %151 = arith.truncf %138 : vector<16x32xf32> to vector<16x32xbf16>
    %cst_50 = arith.constant dense<0.000000e+00> : vector<16x96xf32>
    %152 = tpu.matmul %151, %139, %cst_50 {dimension_numbers = #tpu.dot_dimension_numbers<[1], [0], [0], [1], [0, 0, 1, 1], [], []>} : vector<16x32xbf16>, vector<32x96xbf16>, vector<16x96xf32> -> vector<16x96xf32>
    %153 = vector.broadcast %143 : vector<1x96xf32> to vector<16x96xf32>
    %154 = arith.addf %152, %153 : vector<16x96xf32>
    %155 = vector.extract_strided_slice %154 {offsets = [0, 0], sizes = [16, 8], strides = [1, 1]} : vector<16x96xf32> to vector<16x8xf32>
    %156 = vector.shape_cast %155 : vector<16x8xf32> to vector<2x8x8xf32>
    %157 = vector.extract_strided_slice %154 {offsets = [0, 8], sizes = [16, 8], strides = [1, 1]} : vector<16x96xf32> to vector<16x8xf32>
    %158 = vector.shape_cast %157 : vector<16x8xf32> to vector<2x8x8xf32>
    %159 = vector.extract_strided_slice %154 {offsets = [0, 16], sizes = [16, 8], strides = [1, 1]} : vector<16x96xf32> to vector<16x8xf32>
    %160 = vector.shape_cast %159 : vector<16x8xf32> to vector<2x8x8xf32>
    %161 = vector.extract_strided_slice %154 {offsets = [0, 24], sizes = [16, 8], strides = [1, 1]} : vector<16x96xf32> to vector<16x8xf32>
    %162 = vector.shape_cast %161 : vector<16x8xf32> to vector<2x8x8xf32>
    %163 = tpu.concatenate %156, %158, %160, %162 in 0 : vector<2x8x8xf32>, vector<2x8x8xf32>, vector<2x8x8xf32>, vector<2x8x8xf32> -> vector<8x8x8xf32>
    %164 = vector.extract_strided_slice %154 {offsets = [0, 32], sizes = [16, 8], strides = [1, 1]} : vector<16x96xf32> to vector<16x8xf32>
    %165 = vector.shape_cast %164 : vector<16x8xf32> to vector<2x8x8xf32>
    %166 = vector.extract_strided_slice %154 {offsets = [0, 40], sizes = [16, 8], strides = [1, 1]} : vector<16x96xf32> to vector<16x8xf32>
    %167 = vector.shape_cast %166 : vector<16x8xf32> to vector<2x8x8xf32>
    %168 = vector.extract_strided_slice %154 {offsets = [0, 48], sizes = [16, 8], strides = [1, 1]} : vector<16x96xf32> to vector<16x8xf32>
    %169 = vector.shape_cast %168 : vector<16x8xf32> to vector<2x8x8xf32>
    %170 = vector.extract_strided_slice %154 {offsets = [0, 56], sizes = [16, 8], strides = [1, 1]} : vector<16x96xf32> to vector<16x8xf32>
    %171 = vector.shape_cast %170 : vector<16x8xf32> to vector<2x8x8xf32>
    %172 = tpu.concatenate %165, %167, %169, %171 in 0 : vector<2x8x8xf32>, vector<2x8x8xf32>, vector<2x8x8xf32>, vector<2x8x8xf32> -> vector<8x8x8xf32>
    %173 = vector.extract_strided_slice %154 {offsets = [0, 64], sizes = [16, 8], strides = [1, 1]} : vector<16x96xf32> to vector<16x8xf32>
    %174 = vector.shape_cast %173 : vector<16x8xf32> to vector<2x8x8xf32>
    %175 = vector.extract_strided_slice %154 {offsets = [0, 72], sizes = [16, 8], strides = [1, 1]} : vector<16x96xf32> to vector<16x8xf32>
    %176 = vector.shape_cast %175 : vector<16x8xf32> to vector<2x8x8xf32>
    %177 = vector.extract_strided_slice %154 {offsets = [0, 80], sizes = [16, 8], strides = [1, 1]} : vector<16x96xf32> to vector<16x8xf32>
    %178 = vector.shape_cast %177 : vector<16x8xf32> to vector<2x8x8xf32>
    %179 = vector.extract_strided_slice %154 {offsets = [0, 88], sizes = [16, 8], strides = [1, 1]} : vector<16x96xf32> to vector<16x8xf32>
    %180 = vector.shape_cast %179 : vector<16x8xf32> to vector<2x8x8xf32>
    %181 = tpu.concatenate %174, %176, %178, %180 in 0 : vector<2x8x8xf32>, vector<2x8x8xf32>, vector<2x8x8xf32>, vector<2x8x8xf32> -> vector<8x8x8xf32>
    %182 = arith.truncf %163 : vector<8x8x8xf32> to vector<8x8x8xbf16>
    %183 = arith.truncf %172 : vector<8x8x8xf32> to vector<8x8x8xbf16>
    "tpu.trace_start"() <{level = 10 : i32, message = "zqd,zkd->zqk"}> : () -> ()
    %cst_51 = arith.constant dense<0.000000e+00> : vector<8x8x8xf32>
    %184 = tpu.matmul %182, %183, %cst_51 {dimension_numbers = #tpu.dot_dimension_numbers<[2], [2], [1], [1], [0, 0, 0, 1, 1, 1], [0], [0]>} : vector<8x8x8xbf16>, vector<8x8x8xbf16>, vector<8x8x8xf32> -> vector<8x8x8xf32>
    "tpu.trace_stop"() : () -> ()
    %cst_52 = arith.constant 0.353553385 : f32
    %185 = vector.broadcast %cst_52 : f32 to vector<8x8x8xf32>
    %186 = arith.mulf %184, %185 : vector<8x8x8xf32>
    %cst_53 = arith.constant dense<0xFF800000> : vector<8x8xf32>
    %187 = vector.multi_reduction <maximumf>, %186, %cst_53 [2] : vector<8x8x8xf32> to vector<8x8xf32>
    %188 = vector.shape_cast %187 : vector<8x8xf32> to vector<8x8x1xf32>
    %189 = vector.broadcast %188 : vector<8x8x1xf32> to vector<8x8x8xf32>
    %190 = arith.subf %186, %189 : vector<8x8x8xf32>
    %191 = math.exp %190 : vector<8x8x8xf32>
    %cst_54 = arith.constant dense<0.000000e+00> : vector<8x8xf32>
    %192 = vector.multi_reduction <add>, %191, %cst_54 [2] : vector<8x8x8xf32> to vector<8x8xf32>
    %193 = vector.shape_cast %192 : vector<8x8xf32> to vector<8x8x1xf32>
    %194 = vector.broadcast %193 : vector<8x8x1xf32> to vector<8x8x8xf32>
    %195 = arith.divf %191, %194 : vector<8x8x8xf32>
    %196 = arith.truncf %195 : vector<8x8x8xf32> to vector<8x8x8xbf16>
    %197 = arith.truncf %181 : vector<8x8x8xf32> to vector<8x8x8xbf16>
    "tpu.trace_start"() <{level = 10 : i32, message = "zqk,zkd->zqd"}> : () -> ()
    %cst_55 = arith.constant dense<0.000000e+00> : vector<8x8x8xf32>
    %198 = tpu.matmul %196, %197, %cst_55 {dimension_numbers = #tpu.dot_dimension_numbers<[2], [1], [1], [2], [0, 0, 0, 1, 1, 2], [0], [0]>} : vector<8x8x8xbf16>, vector<8x8x8xbf16>, vector<8x8x8xf32> -> vector<8x8x8xf32>
    "tpu.trace_stop"() : () -> ()
    %199 = vector.extract_strided_slice %198 {offsets = [0, 0, 0], sizes = [2, 8, 8], strides = [1, 1, 1]} : vector<8x8x8xf32> to vector<2x8x8xf32>
    %200 = vector.shape_cast %199 : vector<2x8x8xf32> to vector<16x8xf32>
    %201 = vector.extract_strided_slice %198 {offsets = [2, 0, 0], sizes = [2, 8, 8], strides = [1, 1, 1]} : vector<8x8x8xf32> to vector<2x8x8xf32>
    %202 = vector.shape_cast %201 : vector<2x8x8xf32> to vector<16x8xf32>
    %203 = vector.extract_strided_slice %198 {offsets = [4, 0, 0], sizes = [2, 8, 8], strides = [1, 1, 1]} : vector<8x8x8xf32> to vector<2x8x8xf32>
    %204 = vector.shape_cast %203 : vector<2x8x8xf32> to vector<16x8xf32>
    %205 = vector.extract_strided_slice %198 {offsets = [6, 0, 0], sizes = [2, 8, 8], strides = [1, 1, 1]} : vector<8x8x8xf32> to vector<2x8x8xf32>
    %206 = vector.shape_cast %205 : vector<2x8x8xf32> to vector<16x8xf32>
    %207 = tpu.concatenate %200, %202, %204, %206 in 1 : vector<16x8xf32>, vector<16x8xf32>, vector<16x8xf32>, vector<16x8xf32> -> vector<16x32xf32>
    %208 = arith.truncf %207 : vector<16x32xf32> to vector<16x32xbf16>
    %cst_56 = arith.constant dense<0.000000e+00> : vector<16x32xf32>
    %209 = tpu.matmul %208, %140, %cst_56 {dimension_numbers = #tpu.dot_dimension_numbers<[1], [0], [0], [1], [0, 0, 1, 1], [], []>} : vector<16x32xbf16>, vector<32x32xbf16>, vector<16x32xf32> -> vector<16x32xf32>
    %210 = vector.broadcast %144 : vector<1x32xf32> to vector<16x32xf32>
    %211 = arith.addf %209, %210 : vector<16x32xf32>
    %212 = arith.addf %138, %211 : vector<16x32xf32>
    %cst_57 = arith.constant dense<0.000000e+00> : vector<16xf32>
    %213 = vector.multi_reduction <add>, %212, %cst_57 [1] : vector<16x32xf32> to vector<16xf32>
    %214 = vector.shape_cast %213 : vector<16xf32> to vector<16x1xf32>
    %cst_58 = arith.constant 3.200000e+01 : f32
    %215 = vector.broadcast %cst_58 : f32 to vector<16x1xf32>
    %216 = arith.divf %214, %215 : vector<16x1xf32>
    %217 = vector.broadcast %216 : vector<16x1xf32> to vector<16x32xf32>
    %218 = arith.subf %212, %217 : vector<16x32xf32>
    %219 = arith.mulf %218, %218 : vector<16x32xf32>
    %cst_59 = arith.constant dense<0.000000e+00> : vector<16xf32>
    %220 = vector.multi_reduction <add>, %219, %cst_59 [1] : vector<16x32xf32> to vector<16xf32>
    %221 = vector.shape_cast %220 : vector<16xf32> to vector<16x1xf32>
    %cst_60 = arith.constant 3.200000e+01 : f32
    %222 = vector.broadcast %cst_60 : f32 to vector<16x1xf32>
    %223 = arith.divf %221, %222 : vector<16x1xf32>
    %224 = vector.broadcast %216 : vector<16x1xf32> to vector<16x32xf32>
    %225 = arith.subf %212, %224 : vector<16x32xf32>
    %cst_61 = arith.constant 9.99999974E-6 : f32
    %226 = vector.broadcast %cst_61 : f32 to vector<16x1xf32>
    %227 = arith.addf %223, %226 : vector<16x1xf32>
    %228 = math.rsqrt %227 : vector<16x1xf32>
    %229 = vector.broadcast %228 : vector<16x1xf32> to vector<16x32xf32>
    %230 = arith.mulf %225, %229 : vector<16x32xf32>
    %231 = vector.broadcast %145 : vector<1x32xf32> to vector<16x32xf32>
    %232 = arith.mulf %230, %231 : vector<16x32xf32>
    %233 = vector.broadcast %146 : vector<1x32xf32> to vector<16x32xf32>
    %234 = arith.addf %232, %233 : vector<16x32xf32>
    %235 = arith.truncf %234 : vector<16x32xf32> to vector<16x32xbf16>
    %cst_62 = arith.constant dense<0.000000e+00> : vector<16x64xf32>
    %236 = tpu.matmul %235, %141, %cst_62 {dimension_numbers = #tpu.dot_dimension_numbers<[1], [0], [0], [1], [0, 0, 1, 1], [], []>} : vector<16x32xbf16>, vector<32x64xbf16>, vector<16x64xf32> -> vector<16x64xf32>
    %237 = vector.broadcast %147 : vector<1x64xf32> to vector<16x64xf32>
    %238 = arith.addf %236, %237 : vector<16x64xf32>
    %cst_63 = arith.constant 0.000000e+00 : f32
    %239 = vector.broadcast %cst_63 : f32 to vector<16x64xf32>
    %240 = arith.maximumf %238, %239 : vector<16x64xf32>
    %241 = arith.truncf %240 : vector<16x64xf32> to vector<16x64xbf16>
    %cst_64 = arith.constant dense<0.000000e+00> : vector<16x32xf32>
    %242 = tpu.matmul %241, %142, %cst_64 {dimension_numbers = #tpu.dot_dimension_numbers<[1], [0], [0], [1], [0, 0, 1, 1], [], []>} : vector<16x64xbf16>, vector<64x32xbf16>, vector<16x32xf32> -> vector<16x32xf32>
    %243 = vector.broadcast %148 : vector<1x32xf32> to vector<16x32xf32>
    %244 = arith.addf %242, %243 : vector<16x32xf32>
    %245 = arith.addf %234, %244 : vector<16x32xf32>
    %cst_65 = arith.constant dense<0.000000e+00> : vector<16xf32>
    %246 = vector.multi_reduction <add>, %245, %cst_65 [1] : vector<16x32xf32> to vector<16xf32>
    %247 = vector.shape_cast %246 : vector<16xf32> to vector<16x1xf32>
    %cst_66 = arith.constant 3.200000e+01 : f32
    %248 = vector.broadcast %cst_66 : f32 to vector<16x1xf32>
    %249 = arith.divf %247, %248 : vector<16x1xf32>
    %250 = vector.broadcast %249 : vector<16x1xf32> to vector<16x32xf32>
    %251 = arith.subf %245, %250 : vector<16x32xf32>
    %252 = arith.mulf %251, %251 : vector<16x32xf32>
    %cst_67 = arith.constant dense<0.000000e+00> : vector<16xf32>
    %253 = vector.multi_reduction <add>, %252, %cst_67 [1] : vector<16x32xf32> to vector<16xf32>
    %254 = vector.shape_cast %253 : vector<16xf32> to vector<16x1xf32>
    %cst_68 = arith.constant 3.200000e+01 : f32
    %255 = vector.broadcast %cst_68 : f32 to vector<16x1xf32>
    %256 = arith.divf %254, %255 : vector<16x1xf32>
    %257 = vector.broadcast %249 : vector<16x1xf32> to vector<16x32xf32>
    %258 = arith.subf %245, %257 : vector<16x32xf32>
    %cst_69 = arith.constant 9.99999974E-6 : f32
    %259 = vector.broadcast %cst_69 : f32 to vector<16x1xf32>
    %260 = arith.addf %256, %259 : vector<16x1xf32>
    %261 = math.rsqrt %260 : vector<16x1xf32>
    %262 = vector.broadcast %261 : vector<16x1xf32> to vector<16x32xf32>
    %263 = arith.mulf %258, %262 : vector<16x32xf32>
    %264 = vector.broadcast %149 : vector<1x32xf32> to vector<16x32xf32>
    %265 = arith.mulf %263, %264 : vector<16x32xf32>
    %266 = vector.broadcast %150 : vector<1x32xf32> to vector<16x32xf32>
    %267 = arith.addf %265, %266 : vector<16x32xf32>
    %c384 = arith.constant 384 : index
    %c0_70 = arith.constant 0 : index
    %268 = vector.load %arg1[%c384, %c0_70] : memref<416x128xbf16, #tpu.memory_space<vmem>>, vector<32x128xbf16>
    %c16 = arith.constant 16 : index
    %c0_71 = arith.constant 0 : index
    %269 = vector.load %arg2[%c16, %c0_71] : memref<17x128xf32, #tpu.memory_space<vmem>>, vector<1x128xf32>
    %270 = arith.truncf %267 : vector<16x32xf32> to vector<16x32xbf16>
    %cst_72 = arith.constant dense<0.000000e+00> : vector<16x128xf32>
    %271 = tpu.matmul %270, %268, %cst_72 {dimension_numbers = #tpu.dot_dimension_numbers<[1], [0], [0], [1], [0, 0, 1, 1], [], []>} : vector<16x32xbf16>, vector<32x128xbf16>, vector<16x128xf32> -> vector<16x128xf32>
    %272 = vector.broadcast %269 : vector<1x128xf32> to vector<16x128xf32>
    %273 = arith.addf %271, %272 : vector<16x128xf32>
    %274 = vector.extract_strided_slice %273 {offsets = [0, 0], sizes = [8, 128], strides = [1, 1]} : vector<16x128xf32> to vector<8x128xf32>
    %275 = vector.extract_strided_slice %273 {offsets = [8, 0], sizes = [8, 128], strides = [1, 1]} : vector<16x128xf32> to vector<8x128xf32>
    %276 = tpu.concatenate %274, %275 in 1 : vector<8x128xf32>, vector<8x128xf32> -> vector<8x256xf32>
    %c0_73 = arith.constant 0 : index
    %c0_74 = arith.constant 0 : index
    %277 = vector.load %arg3[%c0_73, %c0_74] : memref<8x256xf32, #tpu.memory_space<vmem>>, vector<8x256xf32>
    tpu.vector_store %arg3[%c0_73, %c0_74], %276 {strides = array<i32>} : memref<8x256xf32, #tpu.memory_space<vmem>>, vector<8x256xf32>,
    return
  }
}

</mosaic_0001>

<llo_original>
// kernel: _lambda_.1
$region0: #{_lambda_.1}
  #allocation0 [shape = 'u32[]', space=smem, size = 0x4, offset = 0x4, fixed_abs, tag = 'smem constant byte address 0x4 - core index']
  #allocation1 [shape = 'u32[72,128]{1,0:T(1,128)}', space=vmem, size = 0x9000, scoped, tag = 'internal scratch']
  %s0 = inlined_call_operand.vmem [shape: s32[16,1], index: 0, kind: input, shape index: {}]
  %s1 = inlined_call_operand.hbm [shape: bf16[416,128], index: 1, kind: input, shape index: {}]
  %s2 = inlined_call_operand.hbm [shape: f32[17,128], index: 2, kind: input, shape index: {}]
  %s3 = inlined_call_operand.vmem [shape: f32[8,256], index: 3, kind: output, shape index: {}]
  %s4 = sld [smem:[#allocation0]]
  $region30: #{_lambda_.1} parent=0
    _
  %s6 = ssub.s32 1, %s4
  %s7 = scalar_select 0, %s6, %s4
  $region1: #{_lambda_.1} parent=0
    #allocation2 [shape = 'u8[106496]{0}', space=vmem, size = 0x1a000, scoped, tag = 'input window, operand 1, single buffered']
    #allocation3 [shape = 's32[1]{0}', space=sflag, size = 0x4, scoped, tag = 'scoped memory for _lambda_.1']
    #allocation4 [shape = 'u8[12288]{0}', space=vmem, size = 0x3000, scoped, tag = 'input window, operand 2, single buffered']
    #allocation5 [shape = 's32[1]{0}', space=sflag, size = 0x4, scoped, tag = 'scoped memory for _lambda_.1']
    %8 = vsyncpa [#allocation3], 0
    %9 = vsyncpa [#allocation5], 0
    // Predicated region
    $region2: #{_lambda_.1} parent=1 // pred_check
      _
    $region3: #{_lambda_.1} parent=1 // pred_check_branch
      %11 = sbr.rel (0) target = $region5
    $region4: #{_lambda_.1} parent=1 // pred_region
      _
    $region5: #{_lambda_.1} parent=1 // pred_fallthru
      _
    // Predicated region
    $region6: #{_lambda_.1} parent=1 // pred_check
      _
    $region7: #{_lambda_.1} parent=1 // pred_check_branch
      %13 = sbr.rel (0) target = $region9
    $region8: #{_lambda_.1} parent=1 // pred_region
      %15 = vsyncadd [#allocation3], 0
      %s16 = sshll.u32 %s1, 4
      %s17 = int_to_ptr.hbm [resolvable:$true] %s16
      %s18 = sshll.u32 [#allocation2], 4
      %s19 = int_to_ptr.vmem [resolvable:$true] %s18
      %24 = dma.hbm_to_vmem [thread:$0]  %s17, 3328, %s19, [#allocation3], 64, 64, 4
    $region9: #{_lambda_.1} parent=1 // pred_fallthru
      _
    // Predicated region
    $region10: #{_lambda_.1} parent=1 // pred_check
      _
    $region11: #{_lambda_.1} parent=1 // pred_check_branch
      %26 = sbr.rel (0) target = $region13
    $region12: #{_lambda_.1} parent=1 // pred_region
      %28 = vsyncadd [#allocation5], 0
      %s29 = sshll.u32 %s2, 4
      %s30 = int_to_ptr.hbm [resolvable:$true] %s29
      %s31 = sshll.u32 [#allocation4], 4
      %s32 = int_to_ptr.vmem [resolvable:$true] %s31
      %37 = dma.hbm_to_vmem [thread:$0]  %s30, 384, %s32, [#allocation5], 128, 128, 8
    $region13: #{_lambda_.1} parent=1 // pred_fallthru
      _
    // Predicated region
    $region14: #{_lambda_.1} parent=1 // pred_check
      _
    $region15: #{_lambda_.1} parent=1 // pred_check_branch
      %39 = sbr.rel (0) target = $region17
    $region16: #{_lambda_.1} parent=1 // pred_region
      %41 = dma.done [#allocation3], 3328
    $region17: #{_lambda_.1} parent=1 // pred_fallthru
      _
    // Predicated region
    $region18: #{_lambda_.1} parent=1 // pred_check
      _
    $region19: #{_lambda_.1} parent=1 // pred_check_branch
      %43 = sbr.rel (0) target = $region21
    $region20: #{_lambda_.1} parent=1 // pred_region
      %45 = dma.done [#allocation5], 384
    $region21: #{_lambda_.1} parent=1 // pred_fallthru
      _
    %v47 = vld [vmem:[%s0] sm:$0xff]
    %v48 = vld [vmem:[%s0 + $0x8] sm:$0xff]
    %v49 = vlaneseq
    %v50 = vand.u32 %v49, 127
    %51 = vset.pattern.permute.xlu0 0
    %52 = vperm.xlu0 %51, %v47
    %v53 = vpop.permute.xlu0 %52
    %54 = vset.pattern.permute.xlu0 0
    %55 = vperm.xlu0 %54, %v48
    %v56 = vpop.permute.xlu0 %55
    %vm57 = vcmp.eq.s32.totalorder %v53, %v50
    %vm58 = vcmp.eq.s32.totalorder %v56, %v50
    %v59 = vsel %vm57, 1.0, 0.0
    %v60 = vsel %vm58, 1.0, 0.0
    %v61 = vpack.c.bf16 %v60, %v59
    %v62 = vld [vmem:[#allocation2] sm:$0xf]
    %v63 = vld [vmem:[#allocation2 + $0x4] sm:$0xf]
    %v64 = vld [vmem:[#allocation2 + $0x8] sm:$0xf]
    %v65 = vld [vmem:[#allocation2 + $0xc] sm:$0xf]
    %v66 = vld [vmem:[#allocation2 + $0x10] sm:$0xf]
    %v67 = vld [vmem:[#allocation2 + $0x14] sm:$0xf]
    %v68 = vld [vmem:[#allocation2 + $0x18] sm:$0xf]
    %v69 = vld [vmem:[#allocation2 + $0x1c] sm:$0xf]
    %v78 = vunpack.c.l.b16 %v62
    %v79 = vunpack.c.l.b16 %v63
    %v80 = vunpack.c.l.b16 %v64
    %v81 = vunpack.c.l.b16 %v65
    %v82 = vunpack.c.l.b16 %v66
    %v83 = vunpack.c.l.b16 %v67
    %v84 = vunpack.c.l.b16 %v68
    %v85 = vunpack.c.l.b16 %v69
    %v86 = vpack.c.b16 %v79, %v78
    %v87 = vpack.c.b16 %v81, %v80
    %v88 = vpack.c.b16 %v83, %v82
    %v89 = vpack.c.b16 %v85, %v84
    %vm94 = vcmask 523264
    %v96 = vsel %vm94, %v61, 0
    %98 = vmatpush.bf16.msra.mxu0 0
    %99 = vmatpush.bf16.msra.mxu0 0
    %100 = vmatpush.bf16.msra.mxu0 0
    %101 = vmatpush.bf16.msra.mxu0 0
    %102 = vmatpush.bf16.msra.mxu0 %v89
    %103 = vmatpush.bf16.msra.mxu0 %v88
    %104 = vmatpush.bf16.msra.mxu0 %v87
    %105 = vmatpush.bf16.msra.mxu0 %v86
    %106 = vmatmul.bf16.gmra.mxu0 %v96
    %v107 = vpop.f32.mrf.mxu0
    %v108 = vadd.f32 0.0, %v107
    %v109 = vpop.f32.mrf.mxu0
    %v110 = vadd.f32 0.0, %v109
    %111 = vdwg.mxu0
    %v112 = vld [vmem:[#allocation2 + $0x20] sm:$0xf]
    %v113 = vld [vmem:[#allocation2 + $0x24] sm:$0xf]
    %v114 = vld [vmem:[#allocation2 + $0x28] sm:$0xf]
    %v115 = vld [vmem:[#allocation2 + $0x2c] sm:$0xf]
    %v116 = vld [vmem:[#allocation2 + $0x30] sm:$0xf]
    %v117 = vld [vmem:[#allocation2 + $0x34] sm:$0xf]
    %v118 = vld [vmem:[#allocation2 + $0x38] sm:$0xf]
    %v119 = vld [vmem:[#allocation2 + $0x3c] sm:$0xf]
    %v120 = vld [vmem:[#allocation2 + $0x40] sm:$0xf]
    %v121 = vld [vmem:[#allocation2 + $0x44] sm:$0xf]
    %v122 = vld [vmem:[#allocation2 + $0x48] sm:$0xf]
    %v123 = vld [vmem:[#allocation2 + $0x4c] sm:$0xf]
    %v124 = vld [vmem:[#allocation2 + $0x50] sm:$0xf]
    %v125 = vld [vmem:[#allocation2 + $0x54] sm:$0xf]
    %v126 = vld [vmem:[#allocation2 + $0x58] sm:$0xf]
    %v127 = vld [vmem:[#allocation2 + $0x5c] sm:$0xf]
    %v128 = vld [vmem:[#allocation2 + $0x60] sm:$0xf]
    %v129 = vld [vmem:[#allocation2 + $0x64] sm:$0xf]
    %v130 = vld [vmem:[#allocation2 + $0x68] sm:$0xf]
    %v131 = vld [vmem:[#allocation2 + $0x6c] sm:$0xf]
    %v132 = vld [vmem:[#allocation4] sm:$0x1]
    %v133 = vld [vmem:[#allocation4 + $0x1] sm:$0x1]
    %v134 = vld [vmem:[#allocation4 + $0x2] sm:$0x1]
    %v135 = vld [vmem:[#allocation4 + $0x3] sm:$0x1]
    %v136 = vld [vmem:[#allocation4 + $0x4] sm:$0x1]
    %v137 = vld [vmem:[#allocation4 + $0x5] sm:$0x1]
    %v138 = vld [vmem:[#allocation4 + $0x6] sm:$0x1]
    %v139 = vld [vmem:[#allocation4 + $0x7] sm:$0x1]
    %v140 = vpack.c.bf16 %v110, %v108
    %v141 = vperm.slane %v132, 0
    %v146 = vunpack.c.l.b16 %v112
    %v147 = vunpack.c.l.b16 %v113
    %v148 = vunpack.c.l.b16 %v114
    %v149 = vunpack.c.l.b16 %v115
    %v150 = vpack.c.b16 %v147, %v146
    %v151 = vpack.c.b16 %v149, %v148
    %vm154 = vcmask 261120
    %v156 = vsel %vm154, %v140, 0
    %158 = vmatpush.bf16.msra.mxu0 0
    %159 = vmatpush.bf16.msra.mxu0 0
    %160 = vmatpush.bf16.msra.mxu0 0
    %161 = vmatpush.bf16.msra.mxu0 0
    %162 = vmatpush.bf16.msra.mxu0 0
    %163 = vmatpush.bf16.msra.mxu0 0
    %164 = vmatpush.bf16.msra.mxu0 %v151
    %165 = vmatpush.bf16.msra.mxu0 %v150
    %166 = vmatmul.bf16.gmra.mxu0 %v156
    %v167 = vpop.f32.mrf.mxu0
    %v168 = vadd.f32 %v141, %v167
    %v169 = vpop.f32.mrf.mxu0
    %v170 = vadd.f32 %v141, %v169
    %171 = vdwg.mxu0
    %174 = vrot.lane.b32.xlu0 %v168, 120
    %v175 = vpop.permute.xlu0 %174
    %176 = vrot.lane.b32.xlu0 %v170, 120
    %v177 = vpop.permute.xlu0 %176
    %180 = vrot.lane.b32.xlu0 %v168, 112
    %v181 = vpop.permute.xlu0 %180
    %182 = vrot.lane.b32.xlu0 %v170, 112
    %v183 = vpop.permute.xlu0 %182
    %186 = vrot.lane.b32.xlu0 %v168, 104
    %v187 = vpop.permute.xlu0 %186
    %188 = vrot.lane.b32.xlu0 %v170, 104
    %v189 = vpop.permute.xlu0 %188
    %v192 = vpack.c.bf16 %v168, %v168
    %v193 = vpack.c.bf16 %v170, %v170
    %v194 = vpack.c.bf16 %v175, %v175
    %v195 = vpack.c.bf16 %v177, %v177
    %v196 = vpack.c.bf16 %v181, %v181
    %v197 = vpack.c.bf16 %v183, %v183
    %v198 = vpack.c.bf16 %v187, %v187
    %v199 = vpack.c.bf16 %v189, %v189
    %v201 = vunpack.c.l.b16 %v192
    %v202 = vpack.c.b16 %v201, %v201
    %203 = vrot.lane.b32.xlu0 %v202, 96
    %v204 = vpop.permute.xlu0 %203
    %vm205 = vcmask 64512
    %v207 = vsel %vm205, %v192, 0
    %v210 = vsel %vm205, %v204, 0
    %212 = vmatpush.bf16.xpose.msra.mxu0 0
    %213 = vmatpush.bf16.xpose.msra.mxu0 0
    %214 = vmatpush.bf16.xpose.msra.mxu0 0
    %215 = vmatpush.bf16.xpose.msra.mxu0 0
    %216 = vmatpush.bf16.xpose.msra.mxu0 0
    %217 = vmatpush.bf16.xpose.msra.mxu0 0
    %218 = vmatpush.bf16.xpose.msra.mxu0 0
    %219 = vmatpush.bf16.xpose.msra.mxu0 %v210
    %220 = vmatmul.bf16.gmra.mxu0 %v207
    %v221 = vpop.f32.mrf.mxu0
    %v222 = vadd.f32 0.0, %v221
    %v223 = vpop.f32.mrf.mxu0
    %224 = vdwg.mxu0
    %v226 = vunpack.c.l.b16 %v193
    %v227 = vpack.c.b16 %v226, %v226
    %228 = vrot.lane.b32.xlu0 %v227, 96
    %v229 = vpop.permute.xlu0 %228
    %v231 = vsel %vm205, %v193, 0
    %v234 = vsel %vm205, %v229, 0
    %236 = vmatpush.bf16.xpose.msra.mxu0 0
    %237 = vmatpush.bf16.xpose.msra.mxu0 0
    %238 = vmatpush.bf16.xpose.msra.mxu0 0
    %239 = vmatpush.bf16.xpose.msra.mxu0 0
    %240 = vmatpush.bf16.xpose.msra.mxu0 0
    %241 = vmatpush.bf16.xpose.msra.mxu0 0
    %242 = vmatpush.bf16.xpose.msra.mxu0 0
    %243 = vmatpush.bf16.xpose.msra.mxu0 %v234
    %244 = vmatmul.bf16.gmra.mxu0 %v231
    %v245 = vpop.f32.mrf.mxu0
    %v246 = vadd.f32 0.0, %v245
    %v247 = vpop.f32.mrf.mxu0
    %248 = vdwg.mxu0
    %v250 = vunpack.c.l.b16 %v194
    %v251 = vpack.c.b16 %v250, %v250
    %252 = vrot.lane.b32.xlu0 %v251, 96
    %v253 = vpop.permute.xlu0 %252
    %v255 = vsel %vm205, %v194, 0
    %v258 = vsel %vm205, %v253, 0
    %260 = vmatpush.bf16.xpose.msra.mxu0 0
    %261 = vmatpush.bf16.xpose.msra.mxu0 0
    %262 = vmatpush.bf16.xpose.msra.mxu0 0
    %263 = vmatpush.bf16.xpose.msra.mxu0 0
    %264 = vmatpush.bf16.xpose.msra.mxu0 0
    %265 = vmatpush.bf16.xpose.msra.mxu0 0
    %266 = vmatpush.bf16.xpose.msra.mxu0 0
    %267 = vmatpush.bf16.xpose.msra.mxu0 %v258
    %268 = vmatmul.bf16.gmra.mxu0 %v255
    %v269 = vpop.f32.mrf.mxu0
    %v270 = vadd.f32 0.0, %v269
    %v271 = vpop.f32.mrf.mxu0
    %272 = vdwg.mxu0
    %v274 = vunpack.c.l.b16 %v195
    %v275 = vpack.c.b16 %v274, %v274
    %276 = vrot.lane.b32.xlu0 %v275, 96
    %v277 = vpop.permute.xlu0 %276
    %v279 = vsel %vm205, %v195, 0
    %v282 = vsel %vm205, %v277, 0
    %284 = vmatpush.bf16.xpose.msra.mxu0 0
    %285 = vmatpush.bf16.xpose.msra.mxu0 0
    %286 = vmatpush.bf16.xpose.msra.mxu0 0
    %287 = vmatpush.bf16.xpose.msra.mxu0 0
    %288 = vmatpush.bf16.xpose.msra.mxu0 0
    %289 = vmatpush.bf16.xpose.msra.mxu0 0
    %290 = vmatpush.bf16.xpose.msra.mxu0 0
    %291 = vmatpush.bf16.xpose.msra.mxu0 %v282
    %292 = vmatmul.bf16.gmra.mxu0 %v279
    %v293 = vpop.f32.mrf.mxu0
    %v294 = vadd.f32 0.0, %v293
    %v295 = vpop.f32.mrf.mxu0
    %296 = vdwg.mxu0
    %v298 = vunpack.c.l.b16 %v196
    %v299 = vpack.c.b16 %v298, %v298
    %300 = vrot.lane.b32.xlu0 %v299, 96
    %v301 = vpop.permute.xlu0 %300
    %v303 = vsel %vm205, %v196, 0
    %v306 = vsel %vm205, %v301, 0
    %308 = vmatpush.bf16.xpose.msra.mxu0 0
    %309 = vmatpush.bf16.xpose.msra.mxu0 0
    %310 = vmatpush.bf16.xpose.msra.mxu0 0
    %311 = vmatpush.bf16.xpose.msra.mxu0 0
    %312 = vmatpush.bf16.xpose.msra.mxu0 0
    %313 = vmatpush.bf16.xpose.msra.mxu0 0
    %314 = vmatpush.bf16.xpose.msra.mxu0 0
    %315 = vmatpush.bf16.xpose.msra.mxu0 %v306
    %316 = vmatmul.bf16.gmra.mxu0 %v303
    %v317 = vpop.f32.mrf.mxu0
    %v318 = vadd.f32 0.0, %v317
    %v319 = vpop.f32.mrf.mxu0
    %320 = vdwg.mxu0
    %v322 = vunpack.c.l.b16 %v197
    %v323 = vpack.c.b16 %v322, %v322
    %324 = vrot.lane.b32.xlu0 %v323, 96
    %v325 = vpop.permute.xlu0 %324
    %v327 = vsel %vm205, %v197, 0
    %v330 = vsel %vm205, %v325, 0
    %332 = vmatpush.bf16.xpose.msra.mxu0 0
    %333 = vmatpush.bf16.xpose.msra.mxu0 0
    %334 = vmatpush.bf16.xpose.msra.mxu0 0
    %335 = vmatpush.bf16.xpose.msra.mxu0 0
    %336 = vmatpush.bf16.xpose.msra.mxu0 0
    %337 = vmatpush.bf16.xpose.msra.mxu0 0
    %338 = vmatpush.bf16.xpose.msra.mxu0 0
    %339 = vmatpush.bf16.xpose.msra.mxu0 %v330
    %340 = vmatmul.bf16.gmra.mxu0 %v327
    %v341 = vpop.f32.mrf.mxu0
    %v342 = vadd.f32 0.0, %v341
    %v343 = vpop.f32.mrf.mxu0
    %344 = vdwg.mxu0
    %v346 = vunpack.c.l.b16 %v198
    %v347 = vpack.c.b16 %v346, %v346
    %348 = vrot.lane.b32.xlu0 %v347, 96
    %v349 = vpop.permute.xlu0 %348
    %v351 = vsel %vm205, %v198, 0
    %v354 = vsel %vm205, %v349, 0
    %356 = vmatpush.bf16.xpose.msra.mxu0 0
    %357 = vmatpush.bf16.xpose.msra.mxu0 0
    %358 = vmatpush.bf16.xpose.msra.mxu0 0
    %359 = vmatpush.bf16.xpose.msra.mxu0 0
    %360 = vmatpush.bf16.xpose.msra.mxu0 0
    %361 = vmatpush.bf16.xpose.msra.mxu0 0
    %362 = vmatpush.bf16.xpose.msra.mxu0 0
    %363 = vmatpush.bf16.xpose.msra.mxu0 %v354
    %364 = vmatmul.bf16.gmra.mxu0 %v351
    %v365 = vpop.f32.mrf.mxu0
    %v366 = vadd.f32 0.0, %v365
    %v367 = vpop.f32.mrf.mxu0
    %368 = vdwg.mxu0
    %v370 = vunpack.c.l.b16 %v199
    %v371 = vpack.c.b16 %v370, %v370
    %372 = vrot.lane.b32.xlu0 %v371, 96
    %v373 = vpop.permute.xlu0 %372
    %v375 = vsel %vm205, %v199, 0
    %v378 = vsel %vm205, %v373, 0
    %380 = vmatpush.bf16.xpose.msra.mxu0 0
    %381 = vmatpush.bf16.xpose.msra.mxu0 0
    %382 = vmatpush.bf16.xpose.msra.mxu0 0
    %383 = vmatpush.bf16.xpose.msra.mxu0 0
    %384 = vmatpush.bf16.xpose.msra.mxu0 0
    %385 = vmatpush.bf16.xpose.msra.mxu0 0
    %386 = vmatpush.bf16.xpose.msra.mxu0 0
    %387 = vmatpush.bf16.xpose.msra.mxu0 %v378
    %388 = vmatmul.bf16.gmra.mxu0 %v375
    %v389 = vpop.f32.mrf.mxu0
    %v390 = vadd.f32 0.0, %v389
    %v391 = vpop.f32.mrf.mxu0
    %392 = vdwg.mxu0
    %v393 = vmul.f32 %v222, 0.35355338
    %v394 = vmul.f32 %v246, 0.35355338
    %v395 = vmul.f32 %v270, 0.35355338
    %v396 = vmul.f32 %v294, 0.35355338
    %v397 = vmul.f32 %v318, 0.35355338
    %v398 = vmul.f32 %v342, 0.35355338
    %v399 = vmul.f32 %v366, 0.35355338
    %v400 = vmul.f32 %v390, 0.35355338
    %v401 = vsel %vm205, %v393, -inf
    %402 = vmax.xlane.f32.xlu0 %v401
    %v403 = vpop.xlane.xlu0 %402
    %v404 = vsel %vm205, %v394, -inf
    %405 = vmax.xlane.f32.xlu0 %v404
    %v406 = vpop.xlane.xlu0 %405
    %v407 = vsel %vm205, %v395, -inf
    %408 = vmax.xlane.f32.xlu0 %v407
    %v409 = vpop.xlane.xlu0 %408
    %v410 = vsel %vm205, %v396, -inf
    %411 = vmax.xlane.f32.xlu0 %v410
    %v412 = vpop.xlane.xlu0 %411
    %v413 = vsel %vm205, %v397, -inf
    %414 = vmax.xlane.f32.xlu0 %v413
    %v415 = vpop.xlane.xlu0 %414
    %v416 = vsel %vm205, %v398, -inf
    %417 = vmax.xlane.f32.xlu0 %v416
    %v418 = vpop.xlane.xlu0 %417
    %v419 = vsel %vm205, %v399, -inf
    %420 = vmax.xlane.f32.xlu0 %v419
    %v421 = vpop.xlane.xlu0 %420
    %v422 = vsel %vm205, %v400, -inf
    %423 = vmax.xlane.f32.xlu0 %v422
    %v424 = vpop.xlane.xlu0 %423
    %v425 = vsub.f32 %v393, %v403
    %v426 = vsub.f32 %v394, %v406
    %v427 = vsub.f32 %v395, %v409
    %v428 = vsub.f32 %v396, %v412
    %v429 = vsub.f32 %v397, %v415
    %v430 = vsub.f32 %v398, %v418
    %v431 = vsub.f32 %v399, %v421
    %v432 = vsub.f32 %v400, %v424
    %v433 = vmul.f32 %v425, 1.442695
    %v434 = vpow.pop %v433
    %v435 = vmul.f32 %v426, 1.442695
    %v436 = vpow.pop %v435
    %v437 = vmul.f32 %v427, 1.442695
    %v438 = vpow.pop %v437
    %v439 = vmul.f32 %v428, 1.442695
    %v440 = vpow.pop %v439
    %v441 = vmul.f32 %v429, 1.442695
    %v442 = vpow.pop %v441
    %v443 = vmul.f32 %v430, 1.442695
    %v444 = vpow.pop %v443
    %v445 = vmul.f32 %v431, 1.442695
    %v446 = vpow.pop %v445
    %v447 = vmul.f32 %v432, 1.442695
    %v448 = vpow.pop %v447
    %v449 = vsel %vm205, %v434, 0.0
    %450 = vadd.xlane.f32.xlu0 %v449
    %v451 = vpop.xlane.xlu0 %450
    %v452 = vsel %vm205, %v436, 0.0
    %453 = vadd.xlane.f32.xlu0 %v452
    %v454 = vpop.xlane.xlu0 %453
    %v455 = vsel %vm205, %v438, 0.0
    %456 = vadd.xlane.f32.xlu0 %v455
    %v457 = vpop.xlane.xlu0 %456
    %v458 = vsel %vm205, %v440, 0.0
    %459 = vadd.xlane.f32.xlu0 %v458
    %v460 = vpop.xlane.xlu0 %459
    %v461 = vsel %vm205, %v442, 0.0
    %462 = vadd.xlane.f32.xlu0 %v461
    %v463 = vpop.xlane.xlu0 %462
    %v464 = vsel %vm205, %v444, 0.0
    %465 = vadd.xlane.f32.xlu0 %v464
    %v466 = vpop.xlane.xlu0 %465
    %v467 = vsel %vm205, %v446, 0.0
    %468 = vadd.xlane.f32.xlu0 %v467
    %v469 = vpop.xlane.xlu0 %468
    %v470 = vsel %vm205, %v448, 0.0
    %471 = vadd.xlane.f32.xlu0 %v470
    %v472 = vpop.xlane.xlu0 %471
    %v473 = vrcp.pop %v451
    %v474 = vmul.f32 %v451, %v473
    %v475 = vsub.f32 1.0, %v474
    %v476 = vmul.f32 %v473, %v475
    %v477 = vadd.f32 %v473, %v476
    %vm478 = vweird.f32 %v451
    %vm479 = vweird.f32 %v473
    %vm480 = vmor %vm478, %vm479
    %v481 = vsel %vm480, %v473, %v477
    %v482 = vand.u32 2147483647, %v451
    %vm483 = vcmp.eq.f32.partialorder %v482, 8.507059e+37
    %v484 = vand.u32 %v451, 2147483648
    %v485 = vor.u32 1.1754944e-38, %v484
    %v486 = vsel %vm483, %v485, %v481
    %v487 = vmul.f32 %v434, %v486
    %v488 = vrcp.pop %v454
    %v489 = vmul.f32 %v454, %v488
    %v490 = vsub.f32 1.0, %v489
    %v491 = vmul.f32 %v488, %v490
    %v492 = vadd.f32 %v488, %v491
    %vm493 = vweird.f32 %v454
    %vm494 = vweird.f32 %v488
    %vm495 = vmor %vm493, %vm494
    %v496 = vsel %vm495, %v488, %v492
    %v497 = vand.u32 2147483647, %v454
    %vm498 = vcmp.eq.f32.partialorder %v497, 8.507059e+37
    %v499 = vand.u32 %v454, 2147483648
    %v500 = vor.u32 1.1754944e-38, %v499
    %v501 = vsel %vm498, %v500, %v496
    %v502 = vmul.f32 %v436, %v501
    %v503 = vrcp.pop %v457
    %v504 = vmul.f32 %v457, %v503
    %v505 = vsub.f32 1.0, %v504
    %v506 = vmul.f32 %v503, %v505
    %v507 = vadd.f32 %v503, %v506
    %vm508 = vweird.f32 %v457
    %vm509 = vweird.f32 %v503
    %vm510 = vmor %vm508, %vm509
    %v511 = vsel %vm510, %v503, %v507
    %v512 = vand.u32 2147483647, %v457
    %vm513 = vcmp.eq.f32.partialorder %v512, 8.507059e+37
    %v514 = vand.u32 %v457, 2147483648
    %v515 = vor.u32 1.1754944e-38, %v514
    %v516 = vsel %vm513, %v515, %v511
    %v517 = vmul.f32 %v438, %v516
    %v518 = vrcp.pop %v460
    %v519 = vmul.f32 %v460, %v518
    %v520 = vsub.f32 1.0, %v519
    %v521 = vmul.f32 %v518, %v520
    %v522 = vadd.f32 %v518, %v521
    %vm523 = vweird.f32 %v460
    %vm524 = vweird.f32 %v518
    %vm525 = vmor %vm523, %vm524
    %v526 = vsel %vm525, %v518, %v522
    %v527 = vand.u32 2147483647, %v460
    %vm528 = vcmp.eq.f32.partialorder %v527, 8.507059e+37
    %v529 = vand.u32 %v460, 2147483648
    %v530 = vor.u32 1.1754944e-38, %v529
    %v531 = vsel %vm528, %v530, %v526
    %v532 = vmul.f32 %v440, %v531
    %v533 = vrcp.pop %v463
    %v534 = vmul.f32 %v463, %v533
    %v535 = vsub.f32 1.0, %v534
    %v536 = vmul.f32 %v533, %v535
    %v537 = vadd.f32 %v533, %v536
    %vm538 = vweird.f32 %v463
    %vm539 = vweird.f32 %v533
    %vm540 = vmor %vm538, %vm539
    %v541 = vsel %vm540, %v533, %v537
    %v542 = vand.u32 2147483647, %v463
    %vm543 = vcmp.eq.f32.partialorder %v542, 8.507059e+37
    %v544 = vand.u32 %v463, 2147483648
    %v545 = vor.u32 1.1754944e-38, %v544
    %v546 = vsel %vm543, %v545, %v541
    %v547 = vmul.f32 %v442, %v546
    %v548 = vrcp.pop %v466
    %v549 = vmul.f32 %v466, %v548
    %v550 = vsub.f32 1.0, %v549
    %v551 = vmul.f32 %v548, %v550
    %v552 = vadd.f32 %v548, %v551
    %vm553 = vweird.f32 %v466
    %vm554 = vweird.f32 %v548
    %vm555 = vmor %vm553, %vm554
    %v556 = vsel %vm555, %v548, %v552
    %v557 = vand.u32 2147483647, %v466
    %vm558 = vcmp.eq.f32.partialorder %v557, 8.507059e+37
    %v559 = vand.u32 %v466, 2147483648
    %v560 = vor.u32 1.1754944e-38, %v559
    %v561 = vsel %vm558, %v560, %v556
    %v562 = vmul.f32 %v444, %v561
    %v563 = vrcp.pop %v469
    %v564 = vmul.f32 %v469, %v563
    %v565 = vsub.f32 1.0, %v564
    %v566 = vmul.f32 %v563, %v565
    %v567 = vadd.f32 %v563, %v566
    %vm568 = vweird.f32 %v469
    %vm569 = vweird.f32 %v563
    %vm570 = vmor %vm568, %vm569
    %v571 = vsel %vm570, %v563, %v567
    %v572 = vand.u32 2147483647, %v469
    %vm573 = vcmp.eq.f32.partialorder %v572, 8.507059e+37
    %v574 = vand.u32 %v469, 2147483648
    %v575 = vor.u32 1.1754944e-38, %v574
    %v576 = vsel %vm573, %v575, %v571
    %v577 = vmul.f32 %v446, %v576
    %v578 = vrcp.pop %v472
    %v579 = vmul.f32 %v472, %v578
    %v580 = vsub.f32 1.0, %v579
    %v581 = vmul.f32 %v578, %v580
    %v582 = vadd.f32 %v578, %v581
    %vm583 = vweird.f32 %v472
    %vm584 = vweird.f32 %v578
    %vm585 = vmor %vm583, %vm584
    %v586 = vsel %vm585, %v578, %v582
    %v587 = vand.u32 2147483647, %v472
    %vm588 = vcmp.eq.f32.partialorder %v587, 8.507059e+37
    %v589 = vand.u32 %v472, 2147483648
    %v590 = vor.u32 1.1754944e-38, %v589
    %v591 = vsel %vm588, %v590, %v586
    %v592 = vmul.f32 %v448, %v591
    %v593 = vpack.c.bf16 %v487, %v487
    %v594 = vpack.c.bf16 %v502, %v502
    %v595 = vpack.c.bf16 %v517, %v517
    %v596 = vpack.c.bf16 %v532, %v532
    %v597 = vpack.c.bf16 %v547, %v547
    %v598 = vpack.c.bf16 %v562, %v562
    %v599 = vpack.c.bf16 %v577, %v577
    %v600 = vpack.c.bf16 %v592, %v592
    %601 = vrot.lane.b32.xlu0 %v202, 64
    %v602 = vpop.permute.xlu0 %601
    %v604 = vsel %vm205, %v593, 0
    %vm606 = vcmask 1043456
    %v608 = vsel %vm606, %v602, 0
    %610 = vmatpush.bf16.msra.mxu0 0
    %611 = vmatpush.bf16.msra.mxu0 0
    %612 = vmatpush.bf16.msra.mxu0 0
    %613 = vmatpush.bf16.msra.mxu0 0
    %614 = vmatpush.bf16.msra.mxu0 0
    %615 = vmatpush.bf16.msra.mxu0 0
    %616 = vmatpush.bf16.msra.mxu0 0
    %617 = vmatpush.bf16.msra.mxu0 %v608
    %618 = vmatmul.bf16.gmra.mxu0 %v604
    %v619 = vpop.f32.mrf.mxu0
    %v620 = vadd.f32 0.0, %v619
    %v621 = vpop.f32.mrf.mxu0
    %622 = vdwg.mxu0
    %623 = vrot.lane.b32.xlu0 %v227, 64
    %v624 = vpop.permute.xlu0 %623
    %v626 = vsel %vm205, %v594, 0
    %v629 = vsel %vm606, %v624, 0
    %631 = vmatpush.bf16.msra.mxu0 0
    %632 = vmatpush.bf16.msra.mxu0 0
    %633 = vmatpush.bf16.msra.mxu0 0
    %634 = vmatpush.bf16.msra.mxu0 0
    %635 = vmatpush.bf16.msra.mxu0 0
    %636 = vmatpush.bf16.msra.mxu0 0
    %637 = vmatpush.bf16.msra.mxu0 0
    %638 = vmatpush.bf16.msra.mxu0 %v629
    %639 = vmatmul.bf16.gmra.mxu0 %v626
    %v640 = vpop.f32.mrf.mxu0
    %v641 = vadd.f32 0.0, %v640
    %v642 = vpop.f32.mrf.mxu0
    %643 = vdwg.mxu0
    %644 = vrot.lane.b32.xlu0 %v251, 64
    %v645 = vpop.permute.xlu0 %644
    %v647 = vsel %vm205, %v595, 0
    %v650 = vsel %vm606, %v645, 0
    %652 = vmatpush.bf16.msra.mxu0 0
    %653 = vmatpush.bf16.msra.mxu0 0
    %654 = vmatpush.bf16.msra.mxu0 0
    %655 = vmatpush.bf16.msra.mxu0 0
    %656 = vmatpush.bf16.msra.mxu0 0
    %657 = vmatpush.bf16.msra.mxu0 0
    %658 = vmatpush.bf16.msra.mxu0 0
    %659 = vmatpush.bf16.msra.mxu0 %v650
    %660 = vmatmul.bf16.gmra.mxu0 %v647
    %v661 = vpop.f32.mrf.mxu0
    %v662 = vadd.f32 0.0, %v661
    %v663 = vpop.f32.mrf.mxu0
    %664 = vdwg.mxu0
    %665 = vrot.lane.b32.xlu0 %v275, 64
    %v666 = vpop.permute.xlu0 %665
    %v668 = vsel %vm205, %v596, 0
    %v671 = vsel %vm606, %v666, 0
    %673 = vmatpush.bf16.msra.mxu0 0
    %674 = vmatpush.bf16.msra.mxu0 0
    %675 = vmatpush.bf16.msra.mxu0 0
    %676 = vmatpush.bf16.msra.mxu0 0
    %677 = vmatpush.bf16.msra.mxu0 0
    %678 = vmatpush.bf16.msra.mxu0 0
    %679 = vmatpush.bf16.msra.mxu0 0
    %680 = vmatpush.bf16.msra.mxu0 %v671
    %681 = vmatmul.bf16.gmra.mxu0 %v668
    %v682 = vpop.f32.mrf.mxu0
    %v683 = vadd.f32 0.0, %v682
    %v684 = vpop.f32.mrf.mxu0
    %685 = vdwg.mxu0
    %686 = vrot.lane.b32.xlu0 %v299, 64
    %v687 = vpop.permute.xlu0 %686
    %v689 = vsel %vm205, %v597, 0
    %v692 = vsel %vm606, %v687, 0
    %694 = vmatpush.bf16.msra.mxu0 0
    %695 = vmatpush.bf16.msra.mxu0 0
    %696 = vmatpush.bf16.msra.mxu0 0
    %697 = vmatpush.bf16.msra.mxu0 0
    %698 = vmatpush.bf16.msra.mxu0 0
    %699 = vmatpush.bf16.msra.mxu0 0
    %700 = vmatpush.bf16.msra.mxu0 0
    %701 = vmatpush.bf16.msra.mxu0 %v692
    %702 = vmatmul.bf16.gmra.mxu0 %v689
    %v703 = vpop.f32.mrf.mxu0
    %v704 = vadd.f32 0.0, %v703
    %v705 = vpop.f32.mrf.mxu0
    %706 = vdwg.mxu0
    %707 = vrot.lane.b32.xlu0 %v323, 64
    %v708 = vpop.permute.xlu0 %707
    %v710 = vsel %vm205, %v598, 0
    %v713 = vsel %vm606, %v708, 0
    %715 = vmatpush.bf16.msra.mxu0 0
    %716 = vmatpush.bf16.msra.mxu0 0
    %717 = vmatpush.bf16.msra.mxu0 0
    %718 = vmatpush.bf16.msra.mxu0 0
    %719 = vmatpush.bf16.msra.mxu0 0
    %720 = vmatpush.bf16.msra.mxu0 0
    %721 = vmatpush.bf16.msra.mxu0 0
    %722 = vmatpush.bf16.msra.mxu0 %v713
    %723 = vmatmul.bf16.gmra.mxu0 %v710
    %v724 = vpop.f32.mrf.mxu0
    %v725 = vadd.f32 0.0, %v724
    %v726 = vpop.f32.mrf.mxu0
    %727 = vdwg.mxu0
    %728 = vrot.lane.b32.xlu0 %v347, 64
    %v729 = vpop.permute.xlu0 %728
    %v731 = vsel %vm205, %v599, 0
    %v734 = vsel %vm606, %v729, 0
    %736 = vmatpush.bf16.msra.mxu0 0
    %737 = vmatpush.bf16.msra.mxu0 0
    %738 = vmatpush.bf16.msra.mxu0 0
    %739 = vmatpush.bf16.msra.mxu0 0
    %740 = vmatpush.bf16.msra.mxu0 0
    %741 = vmatpush.bf16.msra.mxu0 0
    %742 = vmatpush.bf16.msra.mxu0 0
    %743 = vmatpush.bf16.msra.mxu0 %v734
    %744 = vmatmul.bf16.gmra.mxu0 %v731
    %v745 = vpop.f32.mrf.mxu0
    %v746 = vadd.f32 0.0, %v745
    %v747 = vpop.f32.mrf.mxu0
    %748 = vdwg.mxu0
    %749 = vrot.lane.b32.xlu0 %v371, 64
    %v750 = vpop.permute.xlu0 %749
    %v752 = vsel %vm205, %v600, 0
    %v755 = vsel %vm606, %v750, 0
    %757 = vmatpush.bf16.msra.mxu0 0
    %758 = vmatpush.bf16.msra.mxu0 0
    %759 = vmatpush.bf16.msra.mxu0 0
    %760 = vmatpush.bf16.msra.mxu0 0
    %761 = vmatpush.bf16.msra.mxu0 0
    %762 = vmatpush.bf16.msra.mxu0 0
    %763 = vmatpush.bf16.msra.mxu0 0
    %764 = vmatpush.bf16.msra.mxu0 %v755
    %765 = vmatmul.bf16.gmra.mxu0 %v752
    %v766 = vpop.f32.mrf.mxu0
    %v767 = vadd.f32 0.0, %v766
    %v768 = vpop.f32.mrf.mxu0
    %769 = vdwg.mxu0
    %772 = vrot.lane.b32.xlu0 %v662, 8
    %v773 = vpop.permute.xlu0 %772
    %774 = vrot.lane.b32.xlu0 %v683, 8
    %v775 = vpop.permute.xlu0 %774
    %780 = vrot.lane.b32.xlu0 %v704, 16
    %v781 = vpop.permute.xlu0 %780
    %782 = vrot.lane.b32.xlu0 %v725, 16
    %v783 = vpop.permute.xlu0 %782
    %788 = vrot.lane.b32.xlu0 %v746, 24
    %v789 = vpop.permute.xlu0 %788
    %790 = vrot.lane.b32.xlu0 %v767, 24
    %v791 = vpop.permute.xlu0 %790
    %v794 = vsel %vm205, %v620, %v773
    %v795 = vsel %vm205, %v641, %v775
    %vm796 = vcmask 130048
    %v797 = vsel %vm796, %v794, %v781
    %v798 = vsel %vm796, %v795, %v783
    %vm799 = vcmask 195584
    %v800 = vsel %vm799, %v797, %v789
    %v801 = vsel %vm799, %v798, %v791
    %v802 = vpack.c.bf16 %v801, %v800
    %v803 = vperm.slane %v133, 0
    %v808 = vunpack.c.l.b16 %v116
    %v809 = vunpack.c.l.b16 %v117
    %v810 = vunpack.c.l.b16 %v118
    %v811 = vunpack.c.l.b16 %v119
    %v812 = vpack.c.b16 %v809, %v808
    %v813 = vpack.c.b16 %v811, %v810
    %v817 = vsel %vm154, %v802, 0
    %819 = vmatpush.bf16.msra.mxu0 0
    %820 = vmatpush.bf16.msra.mxu0 0
    %821 = vmatpush.bf16.msra.mxu0 0
    %822 = vmatpush.bf16.msra.mxu0 0
    %823 = vmatpush.bf16.msra.mxu0 0
    %824 = vmatpush.bf16.msra.mxu0 0
    %825 = vmatpush.bf16.msra.mxu0 %v813
    %826 = vmatpush.bf16.msra.mxu0 %v812
    %827 = vmatmul.bf16.gmra.mxu0 %v817
    %v828 = vpop.f32.mrf.mxu0
    %v829 = vadd.f32 %v803, %v828
    %v830 = vpop.f32.mrf.mxu0
    %v831 = vadd.f32 %v803, %v830
    %832 = vdwg.mxu0
    %v833 = vadd.f32 %v108, %v829
    %v834 = vadd.f32 %v110, %v831
    %v835 = vsel %vm154, %v833, 0.0
    %836 = vadd.xlane.f32.xlu0 %v835
    %v837 = vpop.xlane.xlu0 %836
    %v838 = vsel %vm154, %v834, 0.0
    %839 = vadd.xlane.f32.xlu0 %v838
    %v840 = vpop.xlane.xlu0 %839
    %v841 = vrcp.pop 32.0
    %v842 = vmul.f32 32.0, %v841
    %v843 = vsub.f32 1.0, %v842
    %v844 = vmul.f32 %v841, %v843
    %v845 = vadd.f32 %v841, %v844
    %vm846 = vweird.f32 %v841
    %v847 = vsel %vm846, %v841, %v845
    %v848 = vmul.f32 %v837, %v847
    %v849 = vmul.f32 %v840, %v847
    %v850 = vsub.f32 %v833, %v848
    %v851 = vsub.f32 %v834, %v849
    %v852 = vmul.f32 %v850, %v850
    %v853 = vmul.f32 %v851, %v851
    %v854 = vsel %vm154, %v852, 0.0
    %855 = vadd.xlane.f32.xlu0 %v854
    %v856 = vpop.xlane.xlu0 %855
    %v857 = vsel %vm154, %v853, 0.0
    %858 = vadd.xlane.f32.xlu0 %v857
    %v859 = vpop.xlane.xlu0 %858
    %v860 = vmul.f32 %v856, %v847
    %v861 = vmul.f32 %v859, %v847
    %v862 = vadd.f32 %v860, 1e-05
    %v863 = vadd.f32 %v861, 1e-05
    %v864 = vrsqrt.pop %v862
    %v865 = vmul.f32 %v864, %v862
    %v866 = vmul.f32 %v865, %v864
    %v867 = vmul.f32 0.5, %v866
    %v868 = vsub.f32 1.5, %v867
    %v869 = vmul.f32 %v864, %v868
    %vm870 = vweird.f32 %v862
    %vm871 = vweird.f32 %v864
    %vm872 = vmor %vm870, %vm871
    %v873 = vsel %vm872, %v864, %v869
    %v874 = vrsqrt.pop %v863
    %v875 = vmul.f32 %v874, %v863
    %v876 = vmul.f32 %v875, %v874
    %v877 = vmul.f32 0.5, %v876
    %v878 = vsub.f32 1.5, %v877
    %v879 = vmul.f32 %v874, %v878
    %vm880 = vweird.f32 %v863
    %vm881 = vweird.f32 %v874
    %vm882 = vmor %vm880, %vm881
    %v883 = vsel %vm882, %v874, %v879
    %v884 = vmul.f32 %v850, %v873
    %v885 = vmul.f32 %v851, %v883
    %v886 = vperm.slane %v134, 0
    %v887 = vmul.f32 %v884, %v886
    %v888 = vmul.f32 %v885, %v886
    %v889 = vperm.slane %v135, 0
    %v890 = vadd.f32 %v887, %v889
    %v891 = vadd.f32 %v888, %v889
    %v892 = vpack.c.bf16 %v891, %v890
    %v893 = vperm.slane %v136, 0
    %v898 = vunpack.c.l.b16 %v120
    %v899 = vunpack.c.l.b16 %v121
    %v900 = vunpack.c.l.b16 %v122
    %v901 = vunpack.c.l.b16 %v123
    %v902 = vpack.c.b16 %v899, %v898
    %v903 = vpack.c.b16 %v901, %v900
    %v907 = vsel %vm154, %v892, 0
    %909 = vmatpush.bf16.msra.mxu0 0
    %910 = vmatpush.bf16.msra.mxu0 0
    %911 = vmatpush.bf16.msra.mxu0 0
    %912 = vmatpush.bf16.msra.mxu0 0
    %913 = vmatpush.bf16.msra.mxu0 0
    %914 = vmatpush.bf16.msra.mxu0 0
    %915 = vmatpush.bf16.msra.mxu0 %v903
    %916 = vmatpush.bf16.msra.mxu0 %v902
    %917 = vmatmul.bf16.gmra.mxu0 %v907
    %v918 = vpop.f32.mrf.mxu0
    %v919 = vadd.f32 %v893, %v918
    %v920 = vpop.f32.mrf.mxu0
    %v921 = vadd.f32 %v893, %v920
    %922 = vdwg.mxu0
    %v923 = vmax.f32 %v919, 0.0
    %v924 = vmax.f32 %v921, 0.0
    %v925 = vpack.c.bf16 %v924, %v923
    %v926 = vperm.slane %v137, 0
    %v935 = vunpack.c.l.b16 %v124
    %v936 = vunpack.c.l.b16 %v125
    %v937 = vunpack.c.l.b16 %v126
    %v938 = vunpack.c.l.b16 %v127
    %v939 = vunpack.c.l.b16 %v128
    %v940 = vunpack.c.l.b16 %v129
    %v941 = vunpack.c.l.b16 %v130
    %v942 = vunpack.c.l.b16 %v131
    %v943 = vpack.c.b16 %v936, %v935
    %v944 = vpack.c.b16 %v938, %v937
    %v945 = vpack.c.b16 %v940, %v939
    %v946 = vpack.c.b16 %v942, %v941
    %v952 = vsel %vm94, %v925, 0
    %954 = vmatpush.bf16.msra.mxu0 0
    %955 = vmatpush.bf16.msra.mxu0 0
    %956 = vmatpush.bf16.msra.mxu0 0
    %957 = vmatpush.bf16.msra.mxu0 0
    %958 = vmatpush.bf16.msra.mxu0 %v946
    %959 = vmatpush.bf16.msra.mxu0 %v945
    %960 = vmatpush.bf16.msra.mxu0 %v944
    %961 = vmatpush.bf16.msra.mxu0 %v943
    %962 = vmatmul.bf16.gmra.mxu0 %v952
    %v963 = vpop.f32.mrf.mxu0
    %v964 = vadd.f32 %v926, %v963
    %v965 = vpop.f32.mrf.mxu0
    %v966 = vadd.f32 %v926, %v965
    %967 = vdwg.mxu0
    %v968 = vadd.f32 %v890, %v964
    %v969 = vadd.f32 %v891, %v966
    %v970 = vsel %vm154, %v968, 0.0
    %971 = vadd.xlane.f32.xlu0 %v970
    %v972 = vpop.xlane.xlu0 %971
    %v973 = vsel %vm154, %v969, 0.0
    %974 = vadd.xlane.f32.xlu0 %v973
    %v975 = vpop.xlane.xlu0 %974
    %v976 = vmul.f32 %v972, %v847
    %v977 = vmul.f32 %v975, %v847
    %v978 = vsub.f32 %v968, %v976
    %v979 = vsub.f32 %v969, %v977
    %v980 = vmul.f32 %v978, %v978
    %v981 = vmul.f32 %v979, %v979
    %v982 = vsel %vm154, %v980, 0.0
    %983 = vadd.xlane.f32.xlu0 %v982
    %v984 = vpop.xlane.xlu0 %983
    %v985 = vsel %vm154, %v981, 0.0
    %986 = vadd.xlane.f32.xlu0 %v985
    %v987 = vpop.xlane.xlu0 %986
    %v988 = vmul.f32 %v984, %v847
    %v989 = vmul.f32 %v987, %v847
    %v990 = vadd.f32 %v988, 1e-05
    %v991 = vadd.f32 %v989, 1e-05
    %v992 = vrsqrt.pop %v990
    %v993 = vmul.f32 %v992, %v990
    %v994 = vmul.f32 %v993, %v992
    %v995 = vmul.f32 0.5, %v994
    %v996 = vsub.f32 1.5, %v995
    %v997 = vmul.f32 %v992, %v996
    %vm998 = vweird.f32 %v990
    %vm999 = vweird.f32 %v992
    %vm1000 = vmor %vm998, %vm999
    %v1001 = vsel %vm1000, %v992, %v997
    %v1002 = vrsqrt.pop %v991
    %v1003 = vmul.f32 %v1002, %v991
    %v1004 = vmul.f32 %v1003, %v1002
    %v1005 = vmul.f32 0.5, %v1004
    %v1006 = vsub.f32 1.5, %v1005
    %v1007 = vmul.f32 %v1002, %v1006
    %vm1008 = vweird.f32 %v991
    %vm1009 = vweird.f32 %v1002
    %vm1010 = vmor %vm1008, %vm1009
    %v1011 = vsel %vm1010, %v1002, %v1007
    %v1012 = vmul.f32 %v978, %v1001
    %v1013 = vmul.f32 %v979, %v1011
    %v1014 = vperm.slane %v138, 0
    %v1015 = vmul.f32 %v1012, %v1014
    %v1016 = vmul.f32 %v1013, %v1014
    %v1017 = vperm.slane %v139, 0
    %v1018 = vadd.f32 %v1015, %v1017
    %v1019 = vadd.f32 %v1016, %v1017
    %v1020 = vld [vmem:[#allocation2 + $0x70] sm:$0xf]
    %v1021 = vld [vmem:[#allocation2 + $0x74] sm:$0xf]
    %v1022 = vld [vmem:[#allocation2 + $0x78] sm:$0xf]
    %v1023 = vld [vmem:[#allocation2 + $0x7c] sm:$0xf]
    %v1024 = vld [vmem:[#allocation2 + $0x80] sm:$0xf]
    %v1025 = vld [vmem:[#allocation2 + $0x84] sm:$0xf]
    %v1026 = vld [vmem:[#allocation2 + $0x88] sm:$0xf]
    %v1027 = vld [vmem:[#allocation2 + $0x8c] sm:$0xf]
    %v1028 = vld [vmem:[#allocation2 + $0x90] sm:$0xf]
    %v1029 = vld [vmem:[#allocation2 + $0x94] sm:$0xf]
    %v1030 = vld [vmem:[#allocation2 + $0x98] sm:$0xf]
    %v1031 = vld [vmem:[#allocation2 + $0x9c] sm:$0xf]
    %v1032 = vld [vmem:[#allocation2 + $0xa0] sm:$0xf]
    %v1033 = vld [vmem:[#allocation2 + $0xa4] sm:$0xf]
    %v1034 = vld [vmem:[#allocation2 + $0xa8] sm:$0xf]
    %v1035 = vld [vmem:[#allocation2 + $0xac] sm:$0xf]
    %v1036 = vld [vmem:[#allocation2 + $0xb0] sm:$0xf]
    %v1037 = vld [vmem:[#allocation2 + $0xb4] sm:$0xf]
    %v1038 = vld [vmem:[#allocation2 + $0xb8] sm:$0xf]
    %v1039 = vld [vmem:[#allocation2 + $0xbc] sm:$0xf]
    %v1040 = vld [vmem:[#allocation4 + $0x8] sm:$0x1]
    %v1041 = vld [vmem:[#allocation4 + $0x9] sm:$0x1]
    %v1042 = vld [vmem:[#allocation4 + $0xa] sm:$0x1]
    %v1043 = vld [vmem:[#allocation4 + $0xb] sm:$0x1]
    %v1044 = vld [vmem:[#allocation4 + $0xc] sm:$0x1]
    %v1045 = vld [vmem:[#allocation4 + $0xd] sm:$0x1]
    %v1046 = vld [vmem:[#allocation4 + $0xe] sm:$0x1]
    %v1047 = vld [vmem:[#allocation4 + $0xf] sm:$0x1]
    %v1048 = vpack.c.bf16 %v1019, %v1018
    %v1049 = vperm.slane %v1040, 0
    %v1054 = vunpack.c.l.b16 %v1020
    %v1055 = vunpack.c.l.b16 %v1021
    %v1056 = vunpack.c.l.b16 %v1022
    %v1057 = vunpack.c.l.b16 %v1023
    %v1058 = vpack.c.b16 %v1055, %v1054
    %v1059 = vpack.c.b16 %v1057, %v1056
    %v1063 = vsel %vm154, %v1048, 0
    %1065 = vmatpush.bf16.msra.mxu0 0
    %1066 = vmatpush.bf16.msra.mxu0 0
    %1067 = vmatpush.bf16.msra.mxu0 0
    %1068 = vmatpush.bf16.msra.mxu0 0
    %1069 = vmatpush.bf16.msra.mxu0 0
    %1070 = vmatpush.bf16.msra.mxu0 0
    %1071 = vmatpush.bf16.msra.mxu0 %v1059
    %1072 = vmatpush.bf16.msra.mxu0 %v1058
    %1073 = vmatmul.bf16.gmra.mxu0 %v1063
    %v1074 = vpop.f32.mrf.mxu0
    %v1075 = vadd.f32 %v1049, %v1074
    %v1076 = vpop.f32.mrf.mxu0
    %v1077 = vadd.f32 %v1049, %v1076
    %1078 = vdwg.mxu0
    %1081 = vrot.lane.b32.xlu0 %v1075, 120
    %v1082 = vpop.permute.xlu0 %1081
    %1083 = vrot.lane.b32.xlu0 %v1077, 120
    %v1084 = vpop.permute.xlu0 %1083
    %1087 = vrot.lane.b32.xlu0 %v1075, 112
    %v1088 = vpop.permute.xlu0 %1087
    %1089 = vrot.lane.b32.xlu0 %v1077, 112
    %v1090 = vpop.permute.xlu0 %1089
    %1093 = vrot.lane.b32.xlu0 %v1075, 104
    %v1094 = vpop.permute.xlu0 %1093
    %1095 = vrot.lane.b32.xlu0 %v1077, 104
    %v1096 = vpop.permute.xlu0 %1095
    %v1099 = vpack.c.bf16 %v1075, %v1075
    %v1100 = vpack.c.bf16 %v1077, %v1077
    %v1101 = vpack.c.bf16 %v1082, %v1082
    %v1102 = vpack.c.bf16 %v1084, %v1084
    %v1103 = vpack.c.bf16 %v1088, %v1088
    %v1104 = vpack.c.bf16 %v1090, %v1090
    %v1105 = vpack.c.bf16 %v1094, %v1094
    %v1106 = vpack.c.bf16 %v1096, %v1096
    %v1108 = vunpack.c.l.b16 %v1099
    %v1109 = vpack.c.b16 %v1108, %v1108
    %1110 = vrot.lane.b32.xlu0 %v1109, 96
    %v1111 = vpop.permute.xlu0 %1110
    %v1113 = vsel %vm205, %v1099, 0
    %v1116 = vsel %vm205, %v1111, 0
    %1118 = vmatpush.bf16.xpose.msra.mxu0 0
    %1119 = vmatpush.bf16.xpose.msra.mxu0 0
    %1120 = vmatpush.bf16.xpose.msra.mxu0 0
    %1121 = vmatpush.bf16.xpose.msra.mxu0 0
    %1122 = vmatpush.bf16.xpose.msra.mxu0 0
    %1123 = vmatpush.bf16.xpose.msra.mxu0 0
    %1124 = vmatpush.bf16.xpose.msra.mxu0 0
    %1125 = vmatpush.bf16.xpose.msra.mxu0 %v1116
    %1126 = vmatmul.bf16.gmra.mxu0 %v1113
    %v1127 = vpop.f32.mrf.mxu0
    %v1128 = vadd.f32 0.0, %v1127
    %v1129 = vpop.f32.mrf.mxu0
    %1130 = vdwg.mxu0
    %v1132 = vunpack.c.l.b16 %v1100
    %v1133 = vpack.c.b16 %v1132, %v1132
    %1134 = vrot.lane.b32.xlu0 %v1133, 96
    %v1135 = vpop.permute.xlu0 %1134
    %v1137 = vsel %vm205, %v1100, 0
    %v1140 = vsel %vm205, %v1135, 0
    %1142 = vmatpush.bf16.xpose.msra.mxu0 0
    %1143 = vmatpush.bf16.xpose.msra.mxu0 0
    %1144 = vmatpush.bf16.xpose.msra.mxu0 0
    %1145 = vmatpush.bf16.xpose.msra.mxu0 0
    %1146 = vmatpush.bf16.xpose.msra.mxu0 0
    %1147 = vmatpush.bf16.xpose.msra.mxu0 0
    %1148 = vmatpush.bf16.xpose.msra.mxu0 0
    %1149 = vmatpush.bf16.xpose.msra.mxu0 %v1140
    %1150 = vmatmul.bf16.gmra.mxu0 %v1137
    %v1151 = vpop.f32.mrf.mxu0
    %v1152 = vadd.f32 0.0, %v1151
    %v1153 = vpop.f32.mrf.mxu0
    %1154 = vdwg.mxu0
    %v1156 = vunpack.c.l.b16 %v1101
    %v1157 = vpack.c.b16 %v1156, %v1156
    %1158 = vrot.lane.b32.xlu0 %v1157, 96
    %v1159 = vpop.permute.xlu0 %1158
    %v1161 = vsel %vm205, %v1101, 0
    %v1164 = vsel %vm205, %v1159, 0
    %1166 = vmatpush.bf16.xpose.msra.mxu0 0
    %1167 = vmatpush.bf16.xpose.msra.mxu0 0
    %1168 = vmatpush.bf16.xpose.msra.mxu0 0
    %1169 = vmatpush.bf16.xpose.msra.mxu0 0
    %1170 = vmatpush.bf16.xpose.msra.mxu0 0
    %1171 = vmatpush.bf16.xpose.msra.mxu0 0
    %1172 = vmatpush.bf16.xpose.msra.mxu0 0
    %1173 = vmatpush.bf16.xpose.msra.mxu0 %v1164
    %1174 = vmatmul.bf16.gmra.mxu0 %v1161
    %v1175 = vpop.f32.mrf.mxu0
    %v1176 = vadd.f32 0.0, %v1175
    %v1177 = vpop.f32.mrf.mxu0
    %1178 = vdwg.mxu0
    %v1180 = vunpack.c.l.b16 %v1102
    %v1181 = vpack.c.b16 %v1180, %v1180
    %1182 = vrot.lane.b32.xlu0 %v1181, 96
    %v1183 = vpop.permute.xlu0 %1182
    %v1185 = vsel %vm205, %v1102, 0
    %v1188 = vsel %vm205, %v1183, 0
    %1190 = vmatpush.bf16.xpose.msra.mxu0 0
    %1191 = vmatpush.bf16.xpose.msra.mxu0 0
    %1192 = vmatpush.bf16.xpose.msra.mxu0 0
    %1193 = vmatpush.bf16.xpose.msra.mxu0 0
    %1194 = vmatpush.bf16.xpose.msra.mxu0 0
    %1195 = vmatpush.bf16.xpose.msra.mxu0 0
    %1196 = vmatpush.bf16.xpose.msra.mxu0 0
    %1197 = vmatpush.bf16.xpose.msra.mxu0 %v1188
    %1198 = vmatmul.bf16.gmra.mxu0 %v1185
    %v1199 = vpop.f32.mrf.mxu0
    %v1200 = vadd.f32 0.0, %v1199
    %v1201 = vpop.f32.mrf.mxu0
    %1202 = vdwg.mxu0
    %v1204 = vunpack.c.l.b16 %v1103
    %v1205 = vpack.c.b16 %v1204, %v1204
    %1206 = vrot.lane.b32.xlu0 %v1205, 96
    %v1207 = vpop.permute.xlu0 %1206
    %v1209 = vsel %vm205, %v1103, 0
    %v1212 = vsel %vm205, %v1207, 0
    %1214 = vmatpush.bf16.xpose.msra.mxu0 0
    %1215 = vmatpush.bf16.xpose.msra.mxu0 0
    %1216 = vmatpush.bf16.xpose.msra.mxu0 0
    %1217 = vmatpush.bf16.xpose.msra.mxu0 0
    %1218 = vmatpush.bf16.xpose.msra.mxu0 0
    %1219 = vmatpush.bf16.xpose.msra.mxu0 0
    %1220 = vmatpush.bf16.xpose.msra.mxu0 0
    %1221 = vmatpush.bf16.xpose.msra.mxu0 %v1212
    %1222 = vmatmul.bf16.gmra.mxu0 %v1209
    %v1223 = vpop.f32.mrf.mxu0
    %v1224 = vadd.f32 0.0, %v1223
    %v1225 = vpop.f32.mrf.mxu0
    %1226 = vdwg.mxu0
    %v1228 = vunpack.c.l.b16 %v1104
    %v1229 = vpack.c.b16 %v1228, %v1228
    %1230 = vrot.lane.b32.xlu0 %v1229, 96
    %v1231 = vpop.permute.xlu0 %1230
    %v1233 = vsel %vm205, %v1104, 0
    %v1236 = vsel %vm205, %v1231, 0
    %1238 = vmatpush.bf16.xpose.msra.mxu0 0
    %1239 = vmatpush.bf16.xpose.msra.mxu0 0
    %1240 = vmatpush.bf16.xpose.msra.mxu0 0
    %1241 = vmatpush.bf16.xpose.msra.mxu0 0
    %1242 = vmatpush.bf16.xpose.msra.mxu0 0
    %1243 = vmatpush.bf16.xpose.msra.mxu0 0
    %1244 = vmatpush.bf16.xpose.msra.mxu0 0
    %1245 = vmatpush.bf16.xpose.msra.mxu0 %v1236
    %1246 = vmatmul.bf16.gmra.mxu0 %v1233
    %v1247 = vpop.f32.mrf.mxu0
    %v1248 = vadd.f32 0.0, %v1247
    %v1249 = vpop.f32.mrf.mxu0
    %1250 = vdwg.mxu0
    %v1252 = vunpack.c.l.b16 %v1105
    %v1253 = vpack.c.b16 %v1252, %v1252
    %1254 = vrot.lane.b32.xlu0 %v1253, 96
    %v1255 = vpop.permute.xlu0 %1254
    %v1257 = vsel %vm205, %v1105, 0
    %v1260 = vsel %vm205, %v1255, 0
    %1262 = vmatpush.bf16.xpose.msra.mxu0 0
    %1263 = vmatpush.bf16.xpose.msra.mxu0 0
    %1264 = vmatpush.bf16.xpose.msra.mxu0 0
    %1265 = vmatpush.bf16.xpose.msra.mxu0 0
    %1266 = vmatpush.bf16.xpose.msra.mxu0 0
    %1267 = vmatpush.bf16.xpose.msra.mxu0 0
    %1268 = vmatpush.bf16.xpose.msra.mxu0 0
    %1269 = vmatpush.bf16.xpose.msra.mxu0 %v1260
    %1270 = vmatmul.bf16.gmra.mxu0 %v1257
    %v1271 = vpop.f32.mrf.mxu0
    %v1272 = vadd.f32 0.0, %v1271
    %v1273 = vpop.f32.mrf.mxu0
    %1274 = vdwg.mxu0
    %v1276 = vunpack.c.l.b16 %v1106
    %v1277 = vpack.c.b16 %v1276, %v1276
    %1278 = vrot.lane.b32.xlu0 %v1277, 96
    %v1279 = vpop.permute.xlu0 %1278
    %v1281 = vsel %vm205, %v1106, 0
    %v1284 = vsel %vm205, %v1279, 0
    %1286 = vmatpush.bf16.xpose.msra.mxu0 0
    %1287 = vmatpush.bf16.xpose.msra.mxu0 0
    %1288 = vmatpush.bf16.xpose.msra.mxu0 0
    %1289 = vmatpush.bf16.xpose.msra.mxu0 0
    %1290 = vmatpush.bf16.xpose.msra.mxu0 0
    %1291 = vmatpush.bf16.xpose.msra.mxu0 0
    %1292 = vmatpush.bf16.xpose.msra.mxu0 0
    %1293 = vmatpush.bf16.xpose.msra.mxu0 %v1284
    %1294 = vmatmul.bf16.gmra.mxu0 %v1281
    %v1295 = vpop.f32.mrf.mxu0
    %v1296 = vadd.f32 0.0, %v1295
    %v1297 = vpop.f32.mrf.mxu0
    %1298 = vdwg.mxu0
    %v1299 = vmul.f32 %v1128, 0.35355338
    %v1300 = vmul.f32 %v1152, 0.35355338
    %v1301 = vmul.f32 %v1176, 0.35355338
    %v1302 = vmul.f32 %v1200, 0.35355338
    %v1303 = vmul.f32 %v1224, 0.35355338
    %v1304 = vmul.f32 %v1248, 0.35355338
    %v1305 = vmul.f32 %v1272, 0.35355338
    %v1306 = vmul.f32 %v1296, 0.35355338
    %v1307 = vsel %vm205, %v1299, -inf
    %1308 = vmax.xlane.f32.xlu0 %v1307
    %v1309 = vpop.xlane.xlu0 %1308
    %v1310 = vsel %vm205, %v1300, -inf
    %1311 = vmax.xlane.f32.xlu0 %v1310
    %v1312 = vpop.xlane.xlu0 %1311
    %v1313 = vsel %vm205, %v1301, -inf
    %1314 = vmax.xlane.f32.xlu0 %v1313
    %v1315 = vpop.xlane.xlu0 %1314
    %v1316 = vsel %vm205, %v1302, -inf
    %1317 = vmax.xlane.f32.xlu0 %v1316
    %v1318 = vpop.xlane.xlu0 %1317
    %v1319 = vsel %vm205, %v1303, -inf
    %1320 = vmax.xlane.f32.xlu0 %v1319
    %v1321 = vpop.xlane.xlu0 %1320
    %v1322 = vsel %vm205, %v1304, -inf
    %1323 = vmax.xlane.f32.xlu0 %v1322
    %v1324 = vpop.xlane.xlu0 %1323
    %v1325 = vsel %vm205, %v1305, -inf
    %1326 = vmax.xlane.f32.xlu0 %v1325
    %v1327 = vpop.xlane.xlu0 %1326
    %v1328 = vsel %vm205, %v1306, -inf
    %1329 = vmax.xlane.f32.xlu0 %v1328
    %v1330 = vpop.xlane.xlu0 %1329
    %v1331 = vsub.f32 %v1299, %v1309
    %v1332 = vsub.f32 %v1300, %v1312
    %v1333 = vsub.f32 %v1301, %v1315
    %v1334 = vsub.f32 %v1302, %v1318
    %v1335 = vsub.f32 %v1303, %v1321
    %v1336 = vsub.f32 %v1304, %v1324
    %v1337 = vsub.f32 %v1305, %v1327
    %v1338 = vsub.f32 %v1306, %v1330
    %v1339 = vmul.f32 %v1331, 1.442695
    %v1340 = vpow.pop %v1339
    %v1341 = vmul.f32 %v1332, 1.442695
    %v1342 = vpow.pop %v1341
    %v1343 = vmul.f32 %v1333, 1.442695
    %v1344 = vpow.pop %v1343
    %v1345 = vmul.f32 %v1334, 1.442695
    %v1346 = vpow.pop %v1345
    %v1347 = vmul.f32 %v1335, 1.442695
    %v1348 = vpow.pop %v1347
    %v1349 = vmul.f32 %v1336, 1.442695
    %v1350 = vpow.pop %v1349
    %v1351 = vmul.f32 %v1337, 1.442695
    %v1352 = vpow.pop %v1351
    %v1353 = vmul.f32 %v1338, 1.442695
    %v1354 = vpow.pop %v1353
    %v1355 = vsel %vm205, %v1340, 0.0
    %1356 = vadd.xlane.f32.xlu0 %v1355
    %v1357 = vpop.xlane.xlu0 %1356
    %v1358 = vsel %vm205, %v1342, 0.0
    %1359 = vadd.xlane.f32.xlu0 %v1358
    %v1360 = vpop.xlane.xlu0 %1359
    %v1361 = vsel %vm205, %v1344, 0.0
    %1362 = vadd.xlane.f32.xlu0 %v1361
    %v1363 = vpop.xlane.xlu0 %1362
    %v1364 = vsel %vm205, %v1346, 0.0
    %1365 = vadd.xlane.f32.xlu0 %v1364
    %v1366 = vpop.xlane.xlu0 %1365
    %v1367 = vsel %vm205, %v1348, 0.0
    %1368 = vadd.xlane.f32.xlu0 %v1367
    %v1369 = vpop.xlane.xlu0 %1368
    %v1370 = vsel %vm205, %v1350, 0.0
    %1371 = vadd.xlane.f32.xlu0 %v1370
    %v1372 = vpop.xlane.xlu0 %1371
    %v1373 = vsel %vm205, %v1352, 0.0
    %1374 = vadd.xlane.f32.xlu0 %v1373
    %v1375 = vpop.xlane.xlu0 %1374
    %v1376 = vsel %vm205, %v1354, 0.0
    %1377 = vadd.xlane.f32.xlu0 %v1376
    %v1378 = vpop.xlane.xlu0 %1377
    %v1379 = vrcp.pop %v1357
    %v1380 = vmul.f32 %v1357, %v1379
    %v1381 = vsub.f32 1.0, %v1380
    %v1382 = vmul.f32 %v1379, %v1381
    %v1383 = vadd.f32 %v1379, %v1382
    %vm1384 = vweird.f32 %v1357
    %vm1385 = vweird.f32 %v1379
    %vm1386 = vmor %vm1384, %vm1385
    %v1387 = vsel %vm1386, %v1379, %v1383
    %v1388 = vand.u32 2147483647, %v1357
    %vm1389 = vcmp.eq.f32.partialorder %v1388, 8.507059e+37
    %v1390 = vand.u32 %v1357, 2147483648
    %v1391 = vor.u32 1.1754944e-38, %v1390
    %v1392 = vsel %vm1389, %v1391, %v1387
    %v1393 = vmul.f32 %v1340, %v1392
    %v1394 = vrcp.pop %v1360
    %v1395 = vmul.f32 %v1360, %v1394
    %v1396 = vsub.f32 1.0, %v1395
    %v1397 = vmul.f32 %v1394, %v1396
    %v1398 = vadd.f32 %v1394, %v1397
    %vm1399 = vweird.f32 %v1360
    %vm1400 = vweird.f32 %v1394
    %vm1401 = vmor %vm1399, %vm1400
    %v1402 = vsel %vm1401, %v1394, %v1398
    %v1403 = vand.u32 2147483647, %v1360
    %vm1404 = vcmp.eq.f32.partialorder %v1403, 8.507059e+37
    %v1405 = vand.u32 %v1360, 2147483648
    %v1406 = vor.u32 1.1754944e-38, %v1405
    %v1407 = vsel %vm1404, %v1406, %v1402
    %v1408 = vmul.f32 %v1342, %v1407
    %v1409 = vrcp.pop %v1363
    %v1410 = vmul.f32 %v1363, %v1409
    %v1411 = vsub.f32 1.0, %v1410
    %v1412 = vmul.f32 %v1409, %v1411
    %v1413 = vadd.f32 %v1409, %v1412
    %vm1414 = vweird.f32 %v1363
    %vm1415 = vweird.f32 %v1409
    %vm1416 = vmor %vm1414, %vm1415
    %v1417 = vsel %vm1416, %v1409, %v1413
    %v1418 = vand.u32 2147483647, %v1363
    %vm1419 = vcmp.eq.f32.partialorder %v1418, 8.507059e+37
    %v1420 = vand.u32 %v1363, 2147483648
    %v1421 = vor.u32 1.1754944e-38, %v1420
    %v1422 = vsel %vm1419, %v1421, %v1417
    %v1423 = vmul.f32 %v1344, %v1422
    %v1424 = vrcp.pop %v1366
    %v1425 = vmul.f32 %v1366, %v1424
    %v1426 = vsub.f32 1.0, %v1425
    %v1427 = vmul.f32 %v1424, %v1426
    %v1428 = vadd.f32 %v1424, %v1427
    %vm1429 = vweird.f32 %v1366
    %vm1430 = vweird.f32 %v1424
    %vm1431 = vmor %vm1429, %vm1430
    %v1432 = vsel %vm1431, %v1424, %v1428
    %v1433 = vand.u32 2147483647, %v1366
    %vm1434 = vcmp.eq.f32.partialorder %v1433, 8.507059e+37
    %v1435 = vand.u32 %v1366, 2147483648
    %v1436 = vor.u32 1.1754944e-38, %v1435
    %v1437 = vsel %vm1434, %v1436, %v1432
    %v1438 = vmul.f32 %v1346, %v1437
    %v1439 = vrcp.pop %v1369
    %v1440 = vmul.f32 %v1369, %v1439
    %v1441 = vsub.f32 1.0, %v1440
    %v1442 = vmul.f32 %v1439, %v1441
    %v1443 = vadd.f32 %v1439, %v1442
    %vm1444 = vweird.f32 %v1369
    %vm1445 = vweird.f32 %v1439
    %vm1446 = vmor %vm1444, %vm1445
    %v1447 = vsel %vm1446, %v1439, %v1443
    %v1448 = vand.u32 2147483647, %v1369
    %vm1449 = vcmp.eq.f32.partialorder %v1448, 8.507059e+37
    %v1450 = vand.u32 %v1369, 2147483648
    %v1451 = vor.u32 1.1754944e-38, %v1450
    %v1452 = vsel %vm1449, %v1451, %v1447
    %v1453 = vmul.f32 %v1348, %v1452
    %v1454 = vrcp.pop %v1372
    %v1455 = vmul.f32 %v1372, %v1454
    %v1456 = vsub.f32 1.0, %v1455
    %v1457 = vmul.f32 %v1454, %v1456
    %v1458 = vadd.f32 %v1454, %v1457
    %vm1459 = vweird.f32 %v1372
    %vm1460 = vweird.f32 %v1454
    %vm1461 = vmor %vm1459, %vm1460
    %v1462 = vsel %vm1461, %v1454, %v1458
    %v1463 = vand.u32 2147483647, %v1372
    %vm1464 = vcmp.eq.f32.partialorder %v1463, 8.507059e+37
    %v1465 = vand.u32 %v1372, 2147483648
    %v1466 = vor.u32 1.1754944e-38, %v1465
    %v1467 = vsel %vm1464, %v1466, %v1462
    %v1468 = vmul.f32 %v1350, %v1467
    %v1469 = vrcp.pop %v1375
    %v1470 = vmul.f32 %v1375, %v1469
    %v1471 = vsub.f32 1.0, %v1470
    %v1472 = vmul.f32 %v1469, %v1471
    %v1473 = vadd.f32 %v1469, %v1472
    %vm1474 = vweird.f32 %v1375
    %vm1475 = vweird.f32 %v1469
    %vm1476 = vmor %vm1474, %vm1475
    %v1477 = vsel %vm1476, %v1469, %v1473
    %v1478 = vand.u32 2147483647, %v1375
    %vm1479 = vcmp.eq.f32.partialorder %v1478, 8.507059e+37
    %v1480 = vand.u32 %v1375, 2147483648
    %v1481 = vor.u32 1.1754944e-38, %v1480
    %v1482 = vsel %vm1479, %v1481, %v1477
    %v1483 = vmul.f32 %v1352, %v1482
    %v1484 = vrcp.pop %v1378
    %v1485 = vmul.f32 %v1378, %v1484
    %v1486 = vsub.f32 1.0, %v1485
    %v1487 = vmul.f32 %v1484, %v1486
    %v1488 = vadd.f32 %v1484, %v1487
    %vm1489 = vweird.f32 %v1378
    %vm1490 = vweird.f32 %v1484
    %vm1491 = vmor %vm1489, %vm1490
    %v1492 = vsel %vm1491, %v1484, %v1488
    %v1493 = vand.u32 2147483647, %v1378
    %vm1494 = vcmp.eq.f32.partialorder %v1493, 8.507059e+37
    %v1495 = vand.u32 %v1378, 2147483648
    %v1496 = vor.u32 1.1754944e-38, %v1495
    %v1497 = vsel %vm1494, %v1496, %v1492
    %v1498 = vmul.f32 %v1354, %v1497
    %v1499 = vpack.c.bf16 %v1393, %v1393
    %v1500 = vpack.c.bf16 %v1408, %v1408
    %v1501 = vpack.c.bf16 %v1423, %v1423
    %v1502 = vpack.c.bf16 %v1438, %v1438
    %v1503 = vpack.c.bf16 %v1453, %v1453
    %v1504 = vpack.c.bf16 %v1468, %v1468
    %v1505 = vpack.c.bf16 %v1483, %v1483
    %v1506 = vpack.c.bf16 %v1498, %v1498
    %1507 = vrot.lane.b32.xlu0 %v1109, 64
    %v1508 = vpop.permute.xlu0 %1507
    %v1510 = vsel %vm205, %v1499, 0
    %v1513 = vsel %vm606, %v1508, 0
    %1515 = vmatpush.bf16.msra.mxu0 0
    %1516 = vmatpush.bf16.msra.mxu0 0
    %1517 = vmatpush.bf16.msra.mxu0 0
    %1518 = vmatpush.bf16.msra.mxu0 0
    %1519 = vmatpush.bf16.msra.mxu0 0
    %1520 = vmatpush.bf16.msra.mxu0 0
    %1521 = vmatpush.bf16.msra.mxu0 0
    %1522 = vmatpush.bf16.msra.mxu0 %v1513
    %1523 = vmatmul.bf16.gmra.mxu0 %v1510
    %v1524 = vpop.f32.mrf.mxu0
    %v1525 = vadd.f32 0.0, %v1524
    %v1526 = vpop.f32.mrf.mxu0
    %1527 = vdwg.mxu0
    %1528 = vrot.lane.b32.xlu0 %v1133, 64
    %v1529 = vpop.permute.xlu0 %1528
    %v1531 = vsel %vm205, %v1500, 0
    %v1534 = vsel %vm606, %v1529, 0
    %1536 = vmatpush.bf16.msra.mxu0 0
    %1537 = vmatpush.bf16.msra.mxu0 0
    %1538 = vmatpush.bf16.msra.mxu0 0
    %1539 = vmatpush.bf16.msra.mxu0 0
    %1540 = vmatpush.bf16.msra.mxu0 0
    %1541 = vmatpush.bf16.msra.mxu0 0
    %1542 = vmatpush.bf16.msra.mxu0 0
    %1543 = vmatpush.bf16.msra.mxu0 %v1534
    %1544 = vmatmul.bf16.gmra.mxu0 %v1531
    %v1545 = vpop.f32.mrf.mxu0
    %v1546 = vadd.f32 0.0, %v1545
    %v1547 = vpop.f32.mrf.mxu0
    %1548 = vdwg.mxu0
    %1549 = vrot.lane.b32.xlu0 %v1157, 64
    %v1550 = vpop.permute.xlu0 %1549
    %v1552 = vsel %vm205, %v1501, 0
    %v1555 = vsel %vm606, %v1550, 0
    %1557 = vmatpush.bf16.msra.mxu0 0
    %1558 = vmatpush.bf16.msra.mxu0 0
    %1559 = vmatpush.bf16.msra.mxu0 0
    %1560 = vmatpush.bf16.msra.mxu0 0
    %1561 = vmatpush.bf16.msra.mxu0 0
    %1562 = vmatpush.bf16.msra.mxu0 0
    %1563 = vmatpush.bf16.msra.mxu0 0
    %1564 = vmatpush.bf16.msra.mxu0 %v1555
    %1565 = vmatmul.bf16.gmra.mxu0 %v1552
    %v1566 = vpop.f32.mrf.mxu0
    %v1567 = vadd.f32 0.0, %v1566
    %v1568 = vpop.f32.mrf.mxu0
    %1569 = vdwg.mxu0
    %1570 = vrot.lane.b32.xlu0 %v1181, 64
    %v1571 = vpop.permute.xlu0 %1570
    %v1573 = vsel %vm205, %v1502, 0
    %v1576 = vsel %vm606, %v1571, 0
    %1578 = vmatpush.bf16.msra.mxu0 0
    %1579 = vmatpush.bf16.msra.mxu0 0
    %1580 = vmatpush.bf16.msra.mxu0 0
    %1581 = vmatpush.bf16.msra.mxu0 0
    %1582 = vmatpush.bf16.msra.mxu0 0
    %1583 = vmatpush.bf16.msra.mxu0 0
    %1584 = vmatpush.bf16.msra.mxu0 0
    %1585 = vmatpush.bf16.msra.mxu0 %v1576
    %1586 = vmatmul.bf16.gmra.mxu0 %v1573
    %v1587 = vpop.f32.mrf.mxu0
    %v1588 = vadd.f32 0.0, %v1587
    %v1589 = vpop.f32.mrf.mxu0
    %1590 = vdwg.mxu0
    %1591 = vrot.lane.b32.xlu0 %v1205, 64
    %v1592 = vpop.permute.xlu0 %1591
    %v1594 = vsel %vm205, %v1503, 0
    %v1597 = vsel %vm606, %v1592, 0
    %1599 = vmatpush.bf16.msra.mxu0 0
    %1600 = vmatpush.bf16.msra.mxu0 0
    %1601 = vmatpush.bf16.msra.mxu0 0
    %1602 = vmatpush.bf16.msra.mxu0 0
    %1603 = vmatpush.bf16.msra.mxu0 0
    %1604 = vmatpush.bf16.msra.mxu0 0
    %1605 = vmatpush.bf16.msra.mxu0 0
    %1606 = vmatpush.bf16.msra.mxu0 %v1597
    %1607 = vmatmul.bf16.gmra.mxu0 %v1594
    %v1608 = vpop.f32.mrf.mxu0
    %v1609 = vadd.f32 0.0, %v1608
    %v1610 = vpop.f32.mrf.mxu0
    %1611 = vdwg.mxu0
    %1612 = vrot.lane.b32.xlu0 %v1229, 64
    %v1613 = vpop.permute.xlu0 %1612
    %v1615 = vsel %vm205, %v1504, 0
    %v1618 = vsel %vm606, %v1613, 0
    %1620 = vmatpush.bf16.msra.mxu0 0
    %1621 = vmatpush.bf16.msra.mxu0 0
    %1622 = vmatpush.bf16.msra.mxu0 0
    %1623 = vmatpush.bf16.msra.mxu0 0
    %1624 = vmatpush.bf16.msra.mxu0 0
    %1625 = vmatpush.bf16.msra.mxu0 0
    %1626 = vmatpush.bf16.msra.mxu0 0
    %1627 = vmatpush.bf16.msra.mxu0 %v1618
    %1628 = vmatmul.bf16.gmra.mxu0 %v1615
    %v1629 = vpop.f32.mrf.mxu0
    %v1630 = vadd.f32 0.0, %v1629
    %v1631 = vpop.f32.mrf.mxu0
    %1632 = vdwg.mxu0
    %1633 = vrot.lane.b32.xlu0 %v1253, 64
    %v1634 = vpop.permute.xlu0 %1633
    %v1636 = vsel %vm205, %v1505, 0
    %v1639 = vsel %vm606, %v1634, 0
    %1641 = vmatpush.bf16.msra.mxu0 0
    %1642 = vmatpush.bf16.msra.mxu0 0
    %1643 = vmatpush.bf16.msra.mxu0 0
    %1644 = vmatpush.bf16.msra.mxu0 0
    %1645 = vmatpush.bf16.msra.mxu0 0
    %1646 = vmatpush.bf16.msra.mxu0 0
    %1647 = vmatpush.bf16.msra.mxu0 0
    %1648 = vmatpush.bf16.msra.mxu0 %v1639
    %1649 = vmatmul.bf16.gmra.mxu0 %v1636
    %v1650 = vpop.f32.mrf.mxu0
    %v1651 = vadd.f32 0.0, %v1650
    %v1652 = vpop.f32.mrf.mxu0
    %1653 = vdwg.mxu0
    %1654 = vrot.lane.b32.xlu0 %v1277, 64
    %v1655 = vpop.permute.xlu0 %1654
    %v1657 = vsel %vm205, %v1506, 0
    %v1660 = vsel %vm606, %v1655, 0
    %1662 = vmatpush.bf16.msra.mxu0 0
    %1663 = vmatpush.bf16.msra.mxu0 0
    %1664 = vmatpush.bf16.msra.mxu0 0
    %1665 = vmatpush.bf16.msra.mxu0 0
    %1666 = vmatpush.bf16.msra.mxu0 0
    %1667 = vmatpush.bf16.msra.mxu0 0
    %1668 = vmatpush.bf16.msra.mxu0 0
    %1669 = vmatpush.bf16.msra.mxu0 %v1660
    %1670 = vmatmul.bf16.gmra.mxu0 %v1657
    %v1671 = vpop.f32.mrf.mxu0
    %v1672 = vadd.f32 0.0, %v1671
    %v1673 = vpop.f32.mrf.mxu0
    %1674 = vdwg.mxu0
    %1677 = vrot.lane.b32.xlu0 %v1567, 8
    %v1678 = vpop.permute.xlu0 %1677
    %1679 = vrot.lane.b32.xlu0 %v1588, 8
    %v1680 = vpop.permute.xlu0 %1679
    %1685 = vrot.lane.b32.xlu0 %v1609, 16
    %v1686 = vpop.permute.xlu0 %1685
    %1687 = vrot.lane.b32.xlu0 %v1630, 16
    %v1688 = vpop.permute.xlu0 %1687
    %1693 = vrot.lane.b32.xlu0 %v1651, 24
    %v1694 = vpop.permute.xlu0 %1693
    %1695 = vrot.lane.b32.xlu0 %v1672, 24
    %v1696 = vpop.permute.xlu0 %1695
    %v1699 = vsel %vm205, %v1525, %v1678
    %v1700 = vsel %vm205, %v1546, %v1680
    %v1701 = vsel %vm796, %v1699, %v1686
    %v1702 = vsel %vm796, %v1700, %v1688
    %v1703 = vsel %vm799, %v1701, %v1694
    %v1704 = vsel %vm799, %v1702, %v1696
    %v1705 = vpack.c.bf16 %v1704, %v1703
    %v1706 = vperm.slane %v1041, 0
    %v1711 = vunpack.c.l.b16 %v1024
    %v1712 = vunpack.c.l.b16 %v1025
    %v1713 = vunpack.c.l.b16 %v1026
    %v1714 = vunpack.c.l.b16 %v1027
    %v1715 = vpack.c.b16 %v1712, %v1711
    %v1716 = vpack.c.b16 %v1714, %v1713
    %v1720 = vsel %vm154, %v1705, 0
    %1722 = vmatpush.bf16.msra.mxu0 0
    %1723 = vmatpush.bf16.msra.mxu0 0
    %1724 = vmatpush.bf16.msra.mxu0 0
    %1725 = vmatpush.bf16.msra.mxu0 0
    %1726 = vmatpush.bf16.msra.mxu0 0
    %1727 = vmatpush.bf16.msra.mxu0 0
    %1728 = vmatpush.bf16.msra.mxu0 %v1716
    %1729 = vmatpush.bf16.msra.mxu0 %v1715
    %1730 = vmatmul.bf16.gmra.mxu0 %v1720
    %v1731 = vpop.f32.mrf.mxu0
    %v1732 = vadd.f32 %v1706, %v1731
    %v1733 = vpop.f32.mrf.mxu0
    %v1734 = vadd.f32 %v1706, %v1733
    %1735 = vdwg.mxu0
    %v1736 = vadd.f32 %v1018, %v1732
    %v1737 = vadd.f32 %v1019, %v1734
    %v1738 = vsel %vm154, %v1736, 0.0
    %1739 = vadd.xlane.f32.xlu0 %v1738
    %v1740 = vpop.xlane.xlu0 %1739
    %v1741 = vsel %vm154, %v1737, 0.0
    %1742 = vadd.xlane.f32.xlu0 %v1741
    %v1743 = vpop.xlane.xlu0 %1742
    %v1744 = vmul.f32 %v1740, %v847
    %v1745 = vmul.f32 %v1743, %v847
    %v1746 = vsub.f32 %v1736, %v1744
    %v1747 = vsub.f32 %v1737, %v1745
    %v1748 = vmul.f32 %v1746, %v1746
    %v1749 = vmul.f32 %v1747, %v1747
    %v1750 = vsel %vm154, %v1748, 0.0
    %1751 = vadd.xlane.f32.xlu0 %v1750
    %v1752 = vpop.xlane.xlu0 %1751
    %v1753 = vsel %vm154, %v1749, 0.0
    %1754 = vadd.xlane.f32.xlu0 %v1753
    %v1755 = vpop.xlane.xlu0 %1754
    %v1756 = vmul.f32 %v1752, %v847
    %v1757 = vmul.f32 %v1755, %v847
    %v1758 = vadd.f32 %v1756, 1e-05
    %v1759 = vadd.f32 %v1757, 1e-05
    %v1760 = vrsqrt.pop %v1758
    %v1761 = vmul.f32 %v1760, %v1758
    %v1762 = vmul.f32 %v1761, %v1760
    %v1763 = vmul.f32 0.5, %v1762
    %v1764 = vsub.f32 1.5, %v1763
    %v1765 = vmul.f32 %v1760, %v1764
    %vm1766 = vweird.f32 %v1758
    %vm1767 = vweird.f32 %v1760
    %vm1768 = vmor %vm1766, %vm1767
    %v1769 = vsel %vm1768, %v1760, %v1765
    %v1770 = vrsqrt.pop %v1759
    %v1771 = vmul.f32 %v1770, %v1759
    %v1772 = vmul.f32 %v1771, %v1770
    %v1773 = vmul.f32 0.5, %v1772
    %v1774 = vsub.f32 1.5, %v1773
    %v1775 = vmul.f32 %v1770, %v1774
    %vm1776 = vweird.f32 %v1759
    %vm1777 = vweird.f32 %v1770
    %vm1778 = vmor %vm1776, %vm1777
    %v1779 = vsel %vm1778, %v1770, %v1775
    %v1780 = vmul.f32 %v1746, %v1769
    %v1781 = vmul.f32 %v1747, %v1779
    %v1782 = vperm.slane %v1042, 0
    %v1783 = vmul.f32 %v1780, %v1782
    %v1784 = vmul.f32 %v1781, %v1782
    %v1785 = vperm.slane %v1043, 0
    %v1786 = vadd.f32 %v1783, %v1785
    %v1787 = vadd.f32 %v1784, %v1785
    %v1788 = vpack.c.bf16 %v1787, %v1786
    %v1789 = vperm.slane %v1044, 0
    %v1794 = vunpack.c.l.b16 %v1028
    %v1795 = vunpack.c.l.b16 %v1029
    %v1796 = vunpack.c.l.b16 %v1030
    %v1797 = vunpack.c.l.b16 %v1031
    %v1798 = vpack.c.b16 %v1795, %v1794
    %v1799 = vpack.c.b16 %v1797, %v1796
    %v1803 = vsel %vm154, %v1788, 0
    %1805 = vmatpush.bf16.msra.mxu0 0
    %1806 = vmatpush.bf16.msra.mxu0 0
    %1807 = vmatpush.bf16.msra.mxu0 0
    %1808 = vmatpush.bf16.msra.mxu0 0
    %1809 = vmatpush.bf16.msra.mxu0 0
    %1810 = vmatpush.bf16.msra.mxu0 0
    %1811 = vmatpush.bf16.msra.mxu0 %v1799
    %1812 = vmatpush.bf16.msra.mxu0 %v1798
    %1813 = vmatmul.bf16.gmra.mxu0 %v1803
    %v1814 = vpop.f32.mrf.mxu0
    %v1815 = vadd.f32 %v1789, %v1814
    %v1816 = vpop.f32.mrf.mxu0
    %v1817 = vadd.f32 %v1789, %v1816
    %1818 = vdwg.mxu0
    %v1819 = vmax.f32 %v1815, 0.0
    %v1820 = vmax.f32 %v1817, 0.0
    %v1821 = vpack.c.bf16 %v1820, %v1819
    %v1822 = vperm.slane %v1045, 0
    %v1831 = vunpack.c.l.b16 %v1032
    %v1832 = vunpack.c.l.b16 %v1033
    %v1833 = vunpack.c.l.b16 %v1034
    %v1834 = vunpack.c.l.b16 %v1035
    %v1835 = vunpack.c.l.b16 %v1036
    %v1836 = vunpack.c.l.b16 %v1037
    %v1837 = vunpack.c.l.b16 %v1038
    %v1838 = vunpack.c.l.b16 %v1039
    %v1839 = vpack.c.b16 %v1832, %v1831
    %v1840 = vpack.c.b16 %v1834, %v1833
    %v1841 = vpack.c.b16 %v1836, %v1835
    %v1842 = vpack.c.b16 %v1838, %v1837
    %v1848 = vsel %vm94, %v1821, 0
    %1850 = vmatpush.bf16.msra.mxu0 0
    %1851 = vmatpush.bf16.msra.mxu0 0
    %1852 = vmatpush.bf16.msra.mxu0 0
    %1853 = vmatpush.bf16.msra.mxu0 0
    %1854 = vmatpush.bf16.msra.mxu0 %v1842
    %1855 = vmatpush.bf16.msra.mxu0 %v1841
    %1856 = vmatpush.bf16.msra.mxu0 %v1840
    %1857 = vmatpush.bf16.msra.mxu0 %v1839
    %1858 = vmatmul.bf16.gmra.mxu0 %v1848
    %v1859 = vpop.f32.mrf.mxu0
    %v1860 = vadd.f32 %v1822, %v1859
    %v1861 = vpop.f32.mrf.mxu0
    %v1862 = vadd.f32 %v1822, %v1861
    %1863 = vdwg.mxu0
    %v1864 = vadd.f32 %v1786, %v1860
    %v1865 = vadd.f32 %v1787, %v1862
    %v1866 = vsel %vm154, %v1864, 0.0
    %1867 = vadd.xlane.f32.xlu0 %v1866
    %v1868 = vpop.xlane.xlu0 %1867
    %v1869 = vsel %vm154, %v1865, 0.0
    %1870 = vadd.xlane.f32.xlu0 %v1869
    %v1871 = vpop.xlane.xlu0 %1870
    %v1872 = vmul.f32 %v1868, %v847
    %v1873 = vmul.f32 %v1871, %v847
    %v1874 = vsub.f32 %v1864, %v1872
    %v1875 = vsub.f32 %v1865, %v1873
    %v1876 = vmul.f32 %v1874, %v1874
    %v1877 = vmul.f32 %v1875, %v1875
    %v1878 = vsel %vm154, %v1876, 0.0
    %1879 = vadd.xlane.f32.xlu0 %v1878
    %v1880 = vpop.xlane.xlu0 %1879
    %v1881 = vsel %vm154, %v1877, 0.0
    %1882 = vadd.xlane.f32.xlu0 %v1881
    %v1883 = vpop.xlane.xlu0 %1882
    %v1884 = vmul.f32 %v1880, %v847
    %v1885 = vmul.f32 %v1883, %v847
    %v1886 = vadd.f32 %v1884, 1e-05
    %v1887 = vadd.f32 %v1885, 1e-05
    %v1888 = vrsqrt.pop %v1886
    %v1889 = vmul.f32 %v1888, %v1886
    %v1890 = vmul.f32 %v1889, %v1888
    %v1891 = vmul.f32 0.5, %v1890
    %v1892 = vsub.f32 1.5, %v1891
    %v1893 = vmul.f32 %v1888, %v1892
    %vm1894 = vweird.f32 %v1886
    %vm1895 = vweird.f32 %v1888
    %vm1896 = vmor %vm1894, %vm1895
    %v1897 = vsel %vm1896, %v1888, %v1893
    %v1898 = vrsqrt.pop %v1887
    %v1899 = vmul.f32 %v1898, %v1887
    %v1900 = vmul.f32 %v1899, %v1898
    %v1901 = vmul.f32 0.5, %v1900
    %v1902 = vsub.f32 1.5, %v1901
    %v1903 = vmul.f32 %v1898, %v1902
    %vm1904 = vweird.f32 %v1887
    %vm1905 = vweird.f32 %v1898
    %vm1906 = vmor %vm1904, %vm1905
    %v1907 = vsel %vm1906, %v1898, %v1903
    %v1908 = vmul.f32 %v1874, %v1897
    %v1909 = vmul.f32 %v1875, %v1907
    %v1910 = vperm.slane %v1046, 0
    %v1911 = vmul.f32 %v1908, %v1910
    %v1912 = vmul.f32 %v1909, %v1910
    %v1913 = vperm.slane %v1047, 0
    %v1914 = vadd.f32 %v1911, %v1913
    %v1915 = vadd.f32 %v1912, %v1913
    %v1916 = vld [vmem:[#allocation2 + $0xc0] sm:$0xf]
    %v1917 = vld [vmem:[#allocation2 + $0xc4] sm:$0xf]
    %v1918 = vld [vmem:[#allocation2 + $0xc8] sm:$0xf]
    %v1919 = vld [vmem:[#allocation2 + $0xcc] sm:$0xf]
    %v1920 = vld [vmem:[#allocation4 + $0x10] sm:$0x1]
    %v1921 = vpack.c.bf16 %v1915, %v1914
    %v1922 = vperm.slane %v1920, 0
    %v1927 = vunpack.c.l.b16 %v1916
    %v1928 = vunpack.c.l.b16 %v1917
    %v1929 = vunpack.c.l.b16 %v1918
    %v1930 = vunpack.c.l.b16 %v1919
    %v1931 = vpack.c.b16 %v1928, %v1927
    %v1932 = vpack.c.b16 %v1930, %v1929
    %v1936 = vsel %vm154, %v1921, 0
    %1938 = vmatpush.bf16.msra.mxu0 0
    %1939 = vmatpush.bf16.msra.mxu0 0
    %1940 = vmatpush.bf16.msra.mxu0 0
    %1941 = vmatpush.bf16.msra.mxu0 0
    %1942 = vmatpush.bf16.msra.mxu0 0
    %1943 = vmatpush.bf16.msra.mxu0 0
    %1944 = vmatpush.bf16.msra.mxu0 %v1932
    %1945 = vmatpush.bf16.msra.mxu0 %v1931
    %1946 = vmatmul.bf16.gmra.mxu0 %v1936
    %v1947 = vpop.f32.mrf.mxu0
    %v1948 = vadd.f32 %v1922, %v1947
    %v1949 = vpop.f32.mrf.mxu0
    %v1950 = vadd.f32 %v1922, %v1949
    %1951 = vdwg.mxu0
    %1952 = vst [vmem:[%s3] sm:$0xff] %v1948
    %1953 = vst [vmem:[%s3 + $0x8] sm:$0xff] %v1950
    // Predicated region
    $region22: #{_lambda_.1} parent=1 // pred_check
      _
    $region23: #{_lambda_.1} parent=1 // pred_check_branch
      %1955 = sbr.rel (0) target = $region25
    $region24: #{_lambda_.1} parent=1 // pred_region
      _
    $region25: #{_lambda_.1} parent=1 // pred_fallthru
      _
    // Predicated region
    $region26: #{_lambda_.1} parent=1 // pred_check
      _
    $region27: #{_lambda_.1} parent=1 // pred_check_branch
      %1957 = sbr.rel (0) target = $region29
    $region28: #{_lambda_.1} parent=1 // pred_region
      _
    $region29: #{_lambda_.1} parent=1 // pred_fallthru
      _
    %1958 = vsyncpa [#allocation3], 1
    %1959 = vsyncpa [#allocation5], 1

</llo_original>
